<compile_context>
chip_gen: v7x
topology: tpu7x:2x2x1
jax: 0.10.0
libtpu: 0.0.40
codegen_flags: <defaults>
</compile_context>

<pallas_src>
import functools

import jax
import jax.numpy as jnp
import numpy as np
from jax import lax
from jax.experimental import pallas as pl
from jax.experimental.pallas import tpu as pltpu

LN_EPS = 1e-5


def _cdiv(a, b):
    return -(-a // b)


def layoutlm_embeddings_kernel(idx_ref, word_ref, table_ref, tt_ref,
                               gamma_ref, beta_ref, out_ref, *, seg_sizes):
    """One row-tile of the fused layout-embedding sum + LayerNorm.

    idx_ref:   (TILE_N, 8) int32 — per-segment LOCAL indices, column order
               (pos, x0, y0, x1, y1, h, w, token_type).
    word_ref:  (TILE_N, H) bf16  — word rows gathered outside the kernel.
    table_ref: (SUM_P, H) bf16   — concatenated 128-row-padded small tables
               (pos | x | y | h | w), VMEM-resident.
    tt_ref:    (V_tt, H) f32     — token-type table (applied via select).
    """
    tile_n = idx_ref.shape[0]
    idx = idx_ref[...]
    pos_c = idx[:, 0:1]
    x0_c, y0_c = idx[:, 1:2], idx[:, 2:3]
    x1_c, y1_c = idx[:, 3:4], idx[:, 4:5]
    h_c, w_c = idx[:, 5:6], idx[:, 6:7]
    tt_c = idx[:, 7:8]

    # Per-segment multi-hot in bf16 (values 0/1/2 are exact in bf16).
    # Element-op count ~ P_pos + 3*P_x + 3*P_y + P_h + P_w instead of 8*SUM_V.
    # TODO(synk): on v5e (no bf16 VALU) an f32 per-segment accumulation with a
    # single bf16 materialization per segment would be marginally better.
    def seg_multihot(width, cols):
        io = lax.broadcasted_iota(jnp.int32, (tile_n, width), 1)
        m = (io == cols[0]).astype(jnp.bfloat16)
        for c in cols[1:]:
            m = m + (io == c).astype(jnp.bfloat16)
        return m

    p_pos, p_x, p_y, p_h, p_w = seg_sizes
    mh = jnp.concatenate(
        [
            seg_multihot(p_pos, [pos_c]),
            seg_multihot(p_x, [x0_c, x1_c]),   # left + right share the x table
            seg_multihot(p_y, [y0_c, y1_c]),   # upper + lower share the y table
            seg_multihot(p_h, [h_c]),
            seg_multihot(p_w, [w_c]),
        ],
        axis=1,
    )                                           # (TILE_N, SUM_P) bf16

    # ONE MXU matmul replaces seven tiny-K gathers.
    layout_emb = jnp.dot(mh, table_ref[...], preferred_element_type=jnp.float32)

    # Token-type (tiny vocab): select instead of a compare+matmul column.
    tt_tab = tt_ref[...].astype(jnp.float32)
    n_tt = tt_tab.shape[0]
    if n_tt == 2:
        tt_emb = jnp.where(tt_c == 0, tt_tab[0:1, :], tt_tab[1:2, :])
    else:
        tt_emb = (tt_c == 0).astype(jnp.float32) * tt_tab[0:1, :]
        for v in range(1, n_tt):
            tt_emb = tt_emb + (tt_c == v).astype(jnp.float32) * tt_tab[v:v + 1, :]

    emb = word_ref[...].astype(jnp.float32) + layout_emb + tt_emb

    # BertLayerNorm (eps=1e-5) in f32.
    mean = jnp.mean(emb, axis=-1, keepdims=True)
    xc = emb - mean
    var = jnp.mean(xc * xc, axis=-1, keepdims=True)
    normed = xc * lax.rsqrt(var + LN_EPS)
    out_ref[...] = (normed * gamma_ref[...] + beta_ref[...]).astype(out_ref.dtype)


def layoutlm_embeddings(input_ids, bbox, params, token_type_ids=None,
                        position_ids=None, *, tile_n=512,
                        out_dtype=jnp.bfloat16):
    """input_ids: (B, S) int32; bbox: (B, S, 4) int32 [x0, y0, x1, y1]."""
    B, S = input_ids.shape
    H = params["word"].shape[1]

    if position_ids is None:
        position_ids = jnp.broadcast_to(
            jnp.arange(S, dtype=jnp.int32)[None, :], (B, S))
    if token_type_ids is None:
        token_type_ids = jnp.zeros_like(input_ids)

    # ---- small-table prep: zero-pad each segment to a multiple of 128 rows
    #      (clean bf16 tiling and full MXU K passes; padded rows never hit).
    segs = [params["pos"], params["x"], params["y"], params["h"], params["w"]]
    seg_sizes = tuple(_cdiv(t.shape[0], 128) * 128 for t in segs)

    def _pad_rows(t, rp):
        r = t.shape[0]
        return t if r == rp else jnp.pad(t, ((0, rp - r), (0, 0)))

    table = jnp.concatenate(
        [_pad_rows(t, rp) for t, rp in zip(segs, seg_sizes)],
        axis=0).astype(jnp.bfloat16)                       # (SUM_P, H)
    sum_p = int(sum(seg_sizes))

    # ---- per-segment LOCAL indices (clamped like an XLA gather).
    # TODO(synk): clamping differs from torch nn.Embedding, which would raise
    # on out-of-range bbox / height / width values.
    x0, y0, x1, y1 = bbox[..., 0], bbox[..., 1], bbox[..., 2], bbox[..., 3]
    hgt, wid = y1 - y0, x1 - x0

    def _clamp(v, t):
        return jnp.clip(v, 0, t.shape[0] - 1)

    cols = [
        _clamp(position_ids, params["pos"]),
        _clamp(x0, params["x"]), _clamp(y0, params["y"]),
        _clamp(x1, params["x"]), _clamp(y1, params["y"]),
        _clamp(hgt, params["h"]), _clamp(wid, params["w"]),
        _clamp(token_type_ids, params["tt"]),
    ]
    n = B * S
    idx = jnp.stack(cols, axis=-1).reshape(n, 8).astype(jnp.int32)
    flat_ids = input_ids.reshape(n).astype(jnp.int32)

    # ---- row tiling of the flattened token axis.  Pad only the tiny id /
    #      index arrays; the padded ids feed the gather so the big (N, H)
    #      word-row array is produced already padded (no extra HBM pass).
    tile_n = max(16, (min(int(tile_n), _cdiv(n, 16) * 16) // 16) * 16)
    n_pad = _cdiv(n, tile_n) * tile_n
    if n_pad != n:
        flat_ids = jnp.pad(flat_ids, (0, n_pad - n))       # pad with id 0
        idx = jnp.pad(idx, ((0, n_pad - n), (0, 0)))

    # Word rows: memory-bound XLA gather, streamed into the kernel as bf16.
    word_emb = jnp.take(params["word"], flat_ids, axis=0).astype(jnp.bfloat16)

    tt_table = params["tt"].astype(jnp.float32)
    gamma = params["gamma"].astype(jnp.float32)
    beta = params["beta"].astype(jnp.float32)

    # ---- VMEM budget from the actual buffers (cap 48 MiB: fits v7x 64 MiB/TC).
    # TODO(synk): on v7x additionally single-buffer the constant-index-map
    # operands (table / tt / gamma / beta) via pipeline_mode=pl.Buffered(1).
    bytes_table = 2 * sum_p * H * 2                        # allow 2x buffering
    bytes_stream = 2 * 2 * (tile_n * H * 2)                # word in + out, bf16
    bytes_idx = 2 * tile_n * 128 * 4                       # idx tile, lane-padded
    bytes_mh = 2 * tile_n * sum_p * 2                      # multi-hot intermediate
    vmem_limit = int(min(max(bytes_table + bytes_stream + bytes_idx + bytes_mh
                             + (8 << 20), 16 << 20), 48 << 20))

    kernel = functools.partial(layoutlm_embeddings_kernel, seg_sizes=seg_sizes)
    out = pl.pallas_call(
        kernel,
        out_shape=jax.ShapeDtypeStruct((n_pad, H), out_dtype),
        grid_spec=pltpu.PrefetchScalarGridSpec(
            num_scalar_prefetch=0,
            grid=(n_pad // tile_n,),
            in_specs=[
                pl.BlockSpec((tile_n, 8), lambda i: (i, 0)),             # indices
                pl.BlockSpec((tile_n, H), lambda i: (i, 0)),             # word rows
                pl.BlockSpec((sum_p, H), lambda i: (0, 0)),              # resident table
                pl.BlockSpec((tt_table.shape[0], H), lambda i: (0, 0)),  # tt table
                pl.BlockSpec((1, H), lambda i: (0, 0)),                  # gamma
                pl.BlockSpec((1, H), lambda i: (0, 0)),                  # beta
            ],
            out_specs=pl.BlockSpec((tile_n, H), lambda i: (i, 0)),
        ),
        compiler_params=pltpu.CompilerParams(
            dimension_semantics=("parallel",),
            vmem_limit_bytes=vmem_limit),
    )(idx, word_emb, table, tt_table, gamma, beta)
    return out[:n].reshape(B, S, H)


def _reference(input_ids, bbox, params):
    """Pure-JAX f32 reference of the PyTorch forward (eval mode)."""
    B, S = input_ids.shape
    pos_ids = jnp.broadcast_to(jnp.arange(S, dtype=jnp.int32)[None, :], (B, S))
    tt_ids = jnp.zeros_like(input_ids)
    emb = (params["pos"][pos_ids]
           + params["x"][bbox[:, :, 0]]
           + params["y"][bbox[:, :, 1]]
           + params["x"][bbox[:, :, 2]]
           + params["y"][bbox[:, :, 3]]
           + params["h"][bbox[:, :, 3] - bbox[:, :, 1]]
           + params["w"][bbox[:, :, 2] - bbox[:, :, 0]]
           + params["word"][input_ids]
           + params["tt"][tt_ids])
    mean = jnp.mean(emb, axis=-1, keepdims=True)
    xc = emb - mean
    var = jnp.mean(xc * xc, axis=-1, keepdims=True)
    normed = xc * lax.rsqrt(var + LN_EPS)
    return normed * params["gamma"][0] + params["beta"][0]


if __name__ == "__main__":
    # Small, deterministic synthetic config.  H=128 keeps the output lane-dense
    # (full unmasked vst) and the MXU N dimension full; real LayoutLM H=768.
    B, S, H = 2, 64, 128
    vocab_size = 512
    max_position = 64
    max_2d = 32
    type_vocab = 2

    key = jax.random.PRNGKey(0)
    keys = jax.random.split(key, 12)

    def emb_init(k, n, d):
        return (0.02 * jax.random.normal(k, (n, d))).astype(jnp.float32)

    word = emb_init(keys[0], vocab_size, H)
    word = word.at[0].set(0.0)  # padding_idx=0 -> zero row
    params = {
        "word": word,
        "pos": emb_init(keys[1], max_position, H),
        "x": emb_init(keys[2], max_2d, H),
        "y": emb_init(keys[3], max_2d, H),
        "h": emb_init(keys[4], max_2d, H),
        "w": emb_init(keys[5], max_2d, H),
        "tt": emb_init(keys[6], type_vocab, H),
        "gamma": (1.0 + 0.1 * jax.random.normal(keys[7], (1, H))).astype(jnp.float32),
        "beta": (0.1 * jax.random.normal(keys[8], (1, H))).astype(jnp.float32),
    }

    input_ids = jax.random.randint(keys[9], (B, S), 0, vocab_size, dtype=jnp.int32)
    xy0 = jax.random.randint(keys[10], (B, S, 2), 0, 8, dtype=jnp.int32)
    wh = jax.random.randint(keys[11], (B, S, 2), 0, 8, dtype=jnp.int32)
    bbox = jnp.concatenate([xy0, xy0 + wh], axis=-1)  # x0, y0, x1, y1 (< max_2d)

    out = layoutlm_embeddings(input_ids, bbox, params)   # default tile_n
    out = jax.block_until_ready(out)

    ref = jax.block_until_ready(_reference(input_ids, bbox, params))
    np.testing.assert_allclose(np.asarray(out.astype(jnp.float32)),
                               np.asarray(ref), rtol=3e-2, atol=3e-2)
    assert out.shape == (B, S, H)
    print("KERNEL_OK")
</pallas_src>

<mosaic_0001>
module attributes {stable_mosaic.version = 11 : i64} {
  func.func @layoutlm_embeddings_kernel(%arg0: i32, %arg1: memref<128x8xi32, #tpu.memory_space<vmem>>, %arg2: memref<128x128xbf16, #tpu.memory_space<vmem>>, %arg3: memref<640x128xbf16, #tpu.memory_space<vmem>>, %arg4: memref<2x128xf32, #tpu.memory_space<vmem>>, %arg5: memref<1x128xf32, #tpu.memory_space<vmem>>, %arg6: memref<1x128xf32, #tpu.memory_space<vmem>>, %arg7: memref<128x128xbf16, #tpu.memory_space<vmem>>) attributes {dimension_semantics = [#tpu.dimension_semantics<parallel>], iteration_bounds = array<i64: 1>, scalar_prefetch = 0 : i64, scratch_operands = 0 : i64, tpu.core_type = #tpu.core_type<tc>, window_params = [{transform_indices = @transform_0, window_bounds = array<i64: 128, 8>}, {transform_indices = @transform_1, window_bounds = array<i64: 128, 128>}, {pipeline_mode = #tpu.pipeline_mode<synchronous>, transform_indices = @transform_2, window_bounds = array<i64: 640, 128>}, {pipeline_mode = #tpu.pipeline_mode<synchronous>, transform_indices = @transform_3, window_bounds = array<i64: 2, 128>}, {pipeline_mode = #tpu.pipeline_mode<synchronous>, transform_indices = @transform_4, window_bounds = array<i64: 1, 128>}, {pipeline_mode = #tpu.pipeline_mode<synchronous>, transform_indices = @transform_5, window_bounds = array<i64: 1, 128>}, {transform_indices = @transform_6, window_bounds = array<i64: 128, 128>}]} {
    %c0 = arith.constant 0 : index
    %c0_0 = arith.constant 0 : index
    %0 = vector.load %arg1[%c0, %c0_0] : memref<128x8xi32, #tpu.memory_space<vmem>>, vector<128x8xi32>
    %1 = vector.extract_strided_slice %0 {offsets = [0, 0], sizes = [128, 1], strides = [1, 1]} : vector<128x8xi32> to vector<128x1xi32>
    %2 = vector.extract_strided_slice %0 {offsets = [0, 1], sizes = [128, 1], strides = [1, 1]} : vector<128x8xi32> to vector<128x1xi32>
    %3 = vector.extract_strided_slice %0 {offsets = [0, 2], sizes = [128, 1], strides = [1, 1]} : vector<128x8xi32> to vector<128x1xi32>
    %4 = vector.extract_strided_slice %0 {offsets = [0, 3], sizes = [128, 1], strides = [1, 1]} : vector<128x8xi32> to vector<128x1xi32>
    %5 = vector.extract_strided_slice %0 {offsets = [0, 4], sizes = [128, 1], strides = [1, 1]} : vector<128x8xi32> to vector<128x1xi32>
    %6 = vector.extract_strided_slice %0 {offsets = [0, 5], sizes = [128, 1], strides = [1, 1]} : vector<128x8xi32> to vector<128x1xi32>
    %7 = vector.extract_strided_slice %0 {offsets = [0, 6], sizes = [128, 1], strides = [1, 1]} : vector<128x8xi32> to vector<128x1xi32>
    %8 = vector.extract_strided_slice %0 {offsets = [0, 7], sizes = [128, 1], strides = [1, 1]} : vector<128x8xi32> to vector<128x1xi32>
    %9 = tpu.iota {dimensions = array<i32: 1>} : vector<128x128xi32>
    %10 = vector.broadcast %1 : vector<128x1xi32> to vector<128x128xi32>
    %11 = arith.cmpi eq, %9, %10 : vector<128x128xi32>
    %12 = arith.extui %11 : vector<128x128xi1> to vector<128x128xi32>
    %13 = arith.sitofp %12 : vector<128x128xi32> to vector<128x128xf32>
    %14 = arith.truncf %13 : vector<128x128xf32> to vector<128x128xbf16>
    %15 = tpu.iota {dimensions = array<i32: 1>} : vector<128x128xi32>
    %16 = vector.broadcast %2 : vector<128x1xi32> to vector<128x128xi32>
    %17 = arith.cmpi eq, %15, %16 : vector<128x128xi32>
    %18 = arith.extui %17 : vector<128x128xi1> to vector<128x128xi32>
    %19 = arith.sitofp %18 : vector<128x128xi32> to vector<128x128xf32>
    %20 = arith.truncf %19 : vector<128x128xf32> to vector<128x128xbf16>
    %21 = vector.broadcast %4 : vector<128x1xi32> to vector<128x128xi32>
    %22 = arith.cmpi eq, %15, %21 : vector<128x128xi32>
    %23 = arith.extui %22 : vector<128x128xi1> to vector<128x128xi32>
    %24 = arith.sitofp %23 : vector<128x128xi32> to vector<128x128xf32>
    %25 = arith.truncf %24 : vector<128x128xf32> to vector<128x128xbf16>
    %26 = arith.addf %20, %25 : vector<128x128xbf16>
    %27 = tpu.iota {dimensions = array<i32: 1>} : vector<128x128xi32>
    %28 = vector.broadcast %3 : vector<128x1xi32> to vector<128x128xi32>
    %29 = arith.cmpi eq, %27, %28 : vector<128x128xi32>
    %30 = arith.extui %29 : vector<128x128xi1> to vector<128x128xi32>
    %31 = arith.sitofp %30 : vector<128x128xi32> to vector<128x128xf32>
    %32 = arith.truncf %31 : vector<128x128xf32> to vector<128x128xbf16>
    %33 = vector.broadcast %5 : vector<128x1xi32> to vector<128x128xi32>
    %34 = arith.cmpi eq, %27, %33 : vector<128x128xi32>
    %35 = arith.extui %34 : vector<128x128xi1> to vector<128x128xi32>
    %36 = arith.sitofp %35 : vector<128x128xi32> to vector<128x128xf32>
    %37 = arith.truncf %36 : vector<128x128xf32> to vector<128x128xbf16>
    %38 = arith.addf %32, %37 : vector<128x128xbf16>
    %39 = tpu.iota {dimensions = array<i32: 1>} : vector<128x128xi32>
    %40 = vector.broadcast %6 : vector<128x1xi32> to vector<128x128xi32>
    %41 = arith.cmpi eq, %39, %40 : vector<128x128xi32>
    %42 = arith.extui %41 : vector<128x128xi1> to vector<128x128xi32>
    %43 = arith.sitofp %42 : vector<128x128xi32> to vector<128x128xf32>
    %44 = arith.truncf %43 : vector<128x128xf32> to vector<128x128xbf16>
    %45 = tpu.iota {dimensions = array<i32: 1>} : vector<128x128xi32>
    %46 = vector.broadcast %7 : vector<128x1xi32> to vector<128x128xi32>
    %47 = arith.cmpi eq, %45, %46 : vector<128x128xi32>
    %48 = arith.extui %47 : vector<128x128xi1> to vector<128x128xi32>
    %49 = arith.sitofp %48 : vector<128x128xi32> to vector<128x128xf32>
    %50 = arith.truncf %49 : vector<128x128xf32> to vector<128x128xbf16>
    %51 = tpu.concatenate %14, %26, %38, %44, %50 in 1 : vector<128x128xbf16>, vector<128x128xbf16>, vector<128x128xbf16>, vector<128x128xbf16>, vector<128x128xbf16> -> vector<128x640xbf16>
    %c0_1 = arith.constant 0 : index
    %c0_2 = arith.constant 0 : index
    %52 = vector.load %arg3[%c0_1, %c0_2] : memref<640x128xbf16, #tpu.memory_space<vmem>>, vector<640x128xbf16>
    %cst = arith.constant dense<0.000000e+00> : vector<128x128xf32>
    %53 = tpu.matmul %51, %52, %cst {dimension_numbers = #tpu.dot_dimension_numbers<[1], [0], [0], [1], [0, 0, 1, 1], [], []>} : vector<128x640xbf16>, vector<640x128xbf16>, vector<128x128xf32> -> vector<128x128xf32>
    %c0_3 = arith.constant 0 : index
    %c0_4 = arith.constant 0 : index
    %54 = vector.load %arg4[%c0_3, %c0_4] : memref<2x128xf32, #tpu.memory_space<vmem>>, vector<2x128xf32>
    %c0_i32 = arith.constant 0 : i32
    %55 = vector.broadcast %c0_i32 : i32 to vector<128x1xi32>
    %56 = arith.cmpi eq, %8, %55 : vector<128x1xi32>
    %57 = vector.extract_strided_slice %54 {offsets = [0, 0], sizes = [1, 128], strides = [1, 1]} : vector<2x128xf32> to vector<1x128xf32>
    %58 = vector.extract_strided_slice %54 {offsets = [1, 0], sizes = [1, 128], strides = [1, 1]} : vector<2x128xf32> to vector<1x128xf32>
    %59 = vector.shape_cast %56 : vector<128x1xi1> to vector<128x1xi1>
    %60 = vector.broadcast %59 : vector<128x1xi1> to vector<128x128xi1>
    %61 = vector.shape_cast %57 : vector<1x128xf32> to vector<1x128xf32>
    %62 = vector.broadcast %61 : vector<1x128xf32> to vector<128x128xf32>
    %63 = vector.shape_cast %58 : vector<1x128xf32> to vector<1x128xf32>
    %64 = vector.broadcast %63 : vector<1x128xf32> to vector<128x128xf32>
    %65 = arith.select %60, %62, %64 : vector<128x128xi1>, vector<128x128xf32>
    %c0_5 = arith.constant 0 : index
    %c0_6 = arith.constant 0 : index
    %66 = vector.load %arg2[%c0_5, %c0_6] : memref<128x128xbf16, #tpu.memory_space<vmem>>, vector<128x128xbf16>
    %67 = arith.extf %66 : vector<128x128xbf16> to vector<128x128xf32>
    %68 = arith.addf %67, %53 : vector<128x128xf32>
    %69 = arith.addf %68, %65 : vector<128x128xf32>
    %cst_7 = arith.constant dense<0.000000e+00> : vector<128xf32>
    %70 = vector.multi_reduction <add>, %69, %cst_7 [1] : vector<128x128xf32> to vector<128xf32>
    %71 = vector.shape_cast %70 : vector<128xf32> to vector<128x1xf32>
    %cst_8 = arith.constant 1.280000e+02 : f32
    %72 = vector.broadcast %cst_8 : f32 to vector<128x1xf32>
    %73 = arith.divf %71, %72 : vector<128x1xf32>
    %74 = vector.broadcast %73 : vector<128x1xf32> to vector<128x128xf32>
    %75 = arith.subf %69, %74 : vector<128x128xf32>
    %76 = arith.mulf %75, %75 : vector<128x128xf32>
    %cst_9 = arith.constant dense<0.000000e+00> : vector<128xf32>
    %77 = vector.multi_reduction <add>, %76, %cst_9 [1] : vector<128x128xf32> to vector<128xf32>
    %78 = vector.shape_cast %77 : vector<128xf32> to vector<128x1xf32>
    %cst_10 = arith.constant 1.280000e+02 : f32
    %79 = vector.broadcast %cst_10 : f32 to vector<128x1xf32>
    %80 = arith.divf %78, %79 : vector<128x1xf32>
    %cst_11 = arith.constant 9.99999974E-6 : f32
    %81 = vector.broadcast %cst_11 : f32 to vector<128x1xf32>
    %82 = arith.addf %80, %81 : vector<128x1xf32>
    %83 = math.rsqrt %82 : vector<128x1xf32>
    %84 = vector.broadcast %83 : vector<128x1xf32> to vector<128x128xf32>
    %85 = arith.mulf %75, %84 : vector<128x128xf32>
    %c0_12 = arith.constant 0 : index
    %c0_13 = arith.constant 0 : index
    %86 = vector.load %arg5[%c0_12, %c0_13] : memref<1x128xf32, #tpu.memory_space<vmem>>, vector<1x128xf32>
    %87 = vector.broadcast %86 : vector<1x128xf32> to vector<128x128xf32>
    %88 = arith.mulf %85, %87 : vector<128x128xf32>
    %c0_14 = arith.constant 0 : index
    %c0_15 = arith.constant 0 : index
    %89 = vector.load %arg6[%c0_14, %c0_15] : memref<1x128xf32, #tpu.memory_space<vmem>>, vector<1x128xf32>
    %90 = vector.broadcast %89 : vector<1x128xf32> to vector<128x128xf32>
    %91 = arith.addf %88, %90 : vector<128x128xf32>
    %92 = arith.truncf %91 : vector<128x128xf32> to vector<128x128xbf16>
    %c0_16 = arith.constant 0 : index
    %c0_17 = arith.constant 0 : index
    %93 = vector.load %arg7[%c0_16, %c0_17] : memref<128x128xbf16, #tpu.memory_space<vmem>>, vector<128x128xbf16>
    tpu.vector_store %arg7[%c0_16, %c0_17], %92 {strides = array<i32>} : memref<128x128xbf16, #tpu.memory_space<vmem>>, vector<128x128xbf16>,
    return
  }
  func.func @transform_0(%arg0: i32) -> (i32, i32) {
    %c0_i32 = arith.constant 0 : i32
    %c0_i32_0 = arith.constant 0 : i32
    return %arg0, %c0_i32 : i32, i32
  }
  func.func @transform_1(%arg0: i32) -> (i32, i32) {
    %c0_i32 = arith.constant 0 : i32
    %c0_i32_0 = arith.constant 0 : i32
    return %arg0, %c0_i32 : i32, i32
  }
  func.func @transform_2(%arg0: i32) -> (i32, i32) {
    %c0_i32 = arith.constant 0 : i32
    %c0_i32_0 = arith.constant 0 : i32
    %c0_i32_1 = arith.constant 0 : i32
    return %c0_i32, %c0_i32_0 : i32, i32
  }
  func.func @transform_3(%arg0: i32) -> (i32, i32) {
    %c0_i32 = arith.constant 0 : i32
    %c0_i32_0 = arith.constant 0 : i32
    %c0_i32_1 = arith.constant 0 : i32
    return %c0_i32, %c0_i32_0 : i32, i32
  }
  func.func @transform_4(%arg0: i32) -> (i32, i32) {
    %c0_i32 = arith.constant 0 : i32
    %c0_i32_0 = arith.constant 0 : i32
    %c0_i32_1 = arith.constant 0 : i32
    return %c0_i32, %c0_i32_0 : i32, i32
  }
  func.func @transform_5(%arg0: i32) -> (i32, i32) {
    %c0_i32 = arith.constant 0 : i32
    %c0_i32_0 = arith.constant 0 : i32
    %c0_i32_1 = arith.constant 0 : i32
    return %c0_i32, %c0_i32_0 : i32, i32
  }
  func.func @transform_6(%arg0: i32) -> (i32, i32) {
    %c0_i32 = arith.constant 0 : i32
    %c0_i32_0 = arith.constant 0 : i32
    return %arg0, %c0_i32 : i32, i32
  }
}

</mosaic_0001>

<llo_original>
// kernel: tpu_custom_call.1
$region0: #{tpu_custom_call.1}
  #allocation0 [shape = 'u32[]', space=smem, size = 0x4, offset = 0x4, fixed_abs, tag = 'smem constant byte address 0x4 - core index']
  #allocation1 [shape = 'u32[144,128]{1,0:T(1,128)}', space=vmem, size = 0x12000, scoped, tag = 'internal scratch']
  %s0 = inlined_call_operand.vmem [shape: s32[128,8], index: 0, kind: input, shape index: {}]
  %s1 = inlined_call_operand.vmem [shape: bf16[128,128], index: 1, kind: input, shape index: {}]
  %s2 = inlined_call_operand.hbm [shape: bf16[640,128], index: 2, kind: input, shape index: {}]
  %s3 = inlined_call_operand.vmem [shape: f32[2,128], index: 3, kind: input, shape index: {}]
  %s4 = inlined_call_operand.vmem [shape: f32[1,128], index: 4, kind: input, shape index: {}]
  %s5 = inlined_call_operand.vmem [shape: f32[1,128], index: 5, kind: input, shape index: {}]
  %s6 = inlined_call_operand.hbm [shape: bf16[128,128], index: 6, kind: output, shape index: {}]
  %s7 = sld [smem:[#allocation0]]
  $region38: #{tpu_custom_call.1} parent=0
    _
  %s9 = ssub.s32 1, %s7
  %s10 = scalar_select 0, %s9, %s7
  $region1: #{tpu_custom_call.1} parent=0
    #allocation2 [shape = 'u8[163840]{0}', space=vmem, size = 0x28000, scoped, tag = 'input window, operand 2, single buffered']
    #allocation3 [shape = 's32[1]{0}', space=sflag, size = 0x4, scoped, tag = 'scoped memory for tpu_custom_call.1']
    #allocation4 [shape = 's32[1]{0}', space=sflag, size = 0x4, scoped, tag = 'scoped memory for tpu_custom_call.1']
    #allocation5 [shape = 'u8[32768]{0}', space=vmem, size = 0x8000, scoped, tag = 'output window, operand 0, single buffered']
    %11 = vsyncpa [#allocation3], 0
    %12 = vsyncpa [#allocation4], 0
    // Predicated region
    $region2: #{tpu_custom_call.1} parent=1 // pred_check
      _
    $region3: #{tpu_custom_call.1} parent=1 // pred_check_branch
      %14 = sbr.rel (0) target = $region5
    $region4: #{tpu_custom_call.1} parent=1 // pred_region
      _
    $region5: #{tpu_custom_call.1} parent=1 // pred_fallthru
      _
    // Predicated region
    $region6: #{tpu_custom_call.1} parent=1 // pred_check
      _
    $region7: #{tpu_custom_call.1} parent=1 // pred_check_branch
      %16 = sbr.rel (0) target = $region9
    $region8: #{tpu_custom_call.1} parent=1 // pred_region
      _
    $region9: #{tpu_custom_call.1} parent=1 // pred_fallthru
      _
    // Predicated region
    $region10: #{tpu_custom_call.1} parent=1 // pred_check
      _
    $region11: #{tpu_custom_call.1} parent=1 // pred_check_branch
      %18 = sbr.rel (0) target = $region13
    $region12: #{tpu_custom_call.1} parent=1 // pred_region
      %s20 = ssub.s32 5120, 5120
      %21 = vsyncadd [#allocation3], %s20
      %s22 = sshll.u32 [#allocation2], 4
      %s23 = int_to_ptr.vmem [resolvable:$true] %s22
      %28 = dma.hbm_to_vmem [thread:$0]  %s2, 5120, %s23, [#allocation3], 64, 64, 4
    $region13: #{tpu_custom_call.1} parent=1 // pred_fallthru
      _
    // Predicated region
    $region14: #{tpu_custom_call.1} parent=1 // pred_check
      _
    $region15: #{tpu_custom_call.1} parent=1 // pred_check_branch
      %30 = sbr.rel (0) target = $region17
    $region16: #{tpu_custom_call.1} parent=1 // pred_region
      _
    $region17: #{tpu_custom_call.1} parent=1 // pred_fallthru
      _
    // Predicated region
    $region18: #{tpu_custom_call.1} parent=1 // pred_check
      _
    $region19: #{tpu_custom_call.1} parent=1 // pred_check_branch
      %32 = sbr.rel (0) target = $region21
    $region20: #{tpu_custom_call.1} parent=1 // pred_region
      _
    $region21: #{tpu_custom_call.1} parent=1 // pred_fallthru
      _
    // Predicated region
    $region22: #{tpu_custom_call.1} parent=1 // pred_check
      _
    $region23: #{tpu_custom_call.1} parent=1 // pred_check_branch
      %34 = sbr.rel (0) target = $region25
    $region24: #{tpu_custom_call.1} parent=1 // pred_region
      _
    $region25: #{tpu_custom_call.1} parent=1 // pred_fallthru
      _
    // Predicated region
    $region26: #{tpu_custom_call.1} parent=1 // pred_check
      _
    $region27: #{tpu_custom_call.1} parent=1 // pred_check_branch
      %36 = sbr.rel (0) target = $region29
    $region28: #{tpu_custom_call.1} parent=1 // pred_region
      %37 = dma.done [#allocation3], 5120
    $region29: #{tpu_custom_call.1} parent=1 // pred_fallthru
      _
    %v39 = vld [vmem:[%s0] sm:$0xff]
    %v40 = vld [vmem:[%s0 + $0x8] sm:$0xff]
    %v41 = vld [vmem:[%s0 + $0x10] sm:$0xff]
    %v42 = vld [vmem:[%s0 + $0x18] sm:$0xff]
    %v43 = vld [vmem:[%s0 + $0x20] sm:$0xff]
    %v44 = vld [vmem:[%s0 + $0x28] sm:$0xff]
    %v45 = vld [vmem:[%s0 + $0x30] sm:$0xff]
    %v46 = vld [vmem:[%s0 + $0x38] sm:$0xff]
    %v47 = vld [vmem:[%s0 + $0x40] sm:$0xff]
    %v48 = vld [vmem:[%s0 + $0x48] sm:$0xff]
    %v49 = vld [vmem:[%s0 + $0x50] sm:$0xff]
    %v50 = vld [vmem:[%s0 + $0x58] sm:$0xff]
    %v51 = vld [vmem:[%s0 + $0x60] sm:$0xff]
    %v52 = vld [vmem:[%s0 + $0x68] sm:$0xff]
    %v53 = vld [vmem:[%s0 + $0x70] sm:$0xff]
    %v54 = vld [vmem:[%s0 + $0x78] sm:$0xff]
    %v55 = vlaneseq
    %v56 = vand.u32 %v55, 127
    %57 = vset.pattern.permute.xlu0 0
    %58 = vperm.xlu0 %57, %v39
    %v59 = vpop.permute.xlu0 %58
    %60 = vset.pattern.permute.xlu0 0
    %61 = vperm.xlu0 %60, %v40
    %v62 = vpop.permute.xlu0 %61
    %63 = vset.pattern.permute.xlu0 0
    %64 = vperm.xlu0 %63, %v41
    %v65 = vpop.permute.xlu0 %64
    %66 = vset.pattern.permute.xlu0 0
    %67 = vperm.xlu0 %66, %v42
    %v68 = vpop.permute.xlu0 %67
    %69 = vset.pattern.permute.xlu0 0
    %70 = vperm.xlu0 %69, %v43
    %v71 = vpop.permute.xlu0 %70
    %72 = vset.pattern.permute.xlu0 0
    %73 = vperm.xlu0 %72, %v44
    %v74 = vpop.permute.xlu0 %73
    %75 = vset.pattern.permute.xlu0 0
    %76 = vperm.xlu0 %75, %v45
    %v77 = vpop.permute.xlu0 %76
    %78 = vset.pattern.permute.xlu0 0
    %79 = vperm.xlu0 %78, %v46
    %v80 = vpop.permute.xlu0 %79
    %81 = vset.pattern.permute.xlu0 0
    %82 = vperm.xlu0 %81, %v47
    %v83 = vpop.permute.xlu0 %82
    %84 = vset.pattern.permute.xlu0 0
    %85 = vperm.xlu0 %84, %v48
    %v86 = vpop.permute.xlu0 %85
    %87 = vset.pattern.permute.xlu0 0
    %88 = vperm.xlu0 %87, %v49
    %v89 = vpop.permute.xlu0 %88
    %90 = vset.pattern.permute.xlu0 0
    %91 = vperm.xlu0 %90, %v50
    %v92 = vpop.permute.xlu0 %91
    %93 = vset.pattern.permute.xlu0 0
    %94 = vperm.xlu0 %93, %v51
    %v95 = vpop.permute.xlu0 %94
    %96 = vset.pattern.permute.xlu0 0
    %97 = vperm.xlu0 %96, %v52
    %v98 = vpop.permute.xlu0 %97
    %99 = vset.pattern.permute.xlu0 0
    %100 = vperm.xlu0 %99, %v53
    %v101 = vpop.permute.xlu0 %100
    %102 = vset.pattern.permute.xlu0 0
    %103 = vperm.xlu0 %102, %v54
    %v104 = vpop.permute.xlu0 %103
    %vm105 = vcmp.eq.s32.totalorder %v56, %v59
    %vm106 = vcmp.eq.s32.totalorder %v56, %v62
    %vm107 = vcmp.eq.s32.totalorder %v56, %v65
    %vm108 = vcmp.eq.s32.totalorder %v56, %v68
    %vm109 = vcmp.eq.s32.totalorder %v56, %v71
    %vm110 = vcmp.eq.s32.totalorder %v56, %v74
    %vm111 = vcmp.eq.s32.totalorder %v56, %v77
    %vm112 = vcmp.eq.s32.totalorder %v56, %v80
    %vm113 = vcmp.eq.s32.totalorder %v56, %v83
    %vm114 = vcmp.eq.s32.totalorder %v56, %v86
    %vm115 = vcmp.eq.s32.totalorder %v56, %v89
    %vm116 = vcmp.eq.s32.totalorder %v56, %v92
    %vm117 = vcmp.eq.s32.totalorder %v56, %v95
    %vm118 = vcmp.eq.s32.totalorder %v56, %v98
    %vm119 = vcmp.eq.s32.totalorder %v56, %v101
    %vm120 = vcmp.eq.s32.totalorder %v56, %v104
    %v121 = vsel %vm105, 1, 0
    %v122 = vsel %vm106, 1, 0
    %v123 = vsel %vm107, 1, 0
    %v124 = vsel %vm108, 1, 0
    %v125 = vsel %vm109, 1, 0
    %v126 = vsel %vm110, 1, 0
    %v127 = vsel %vm111, 1, 0
    %v128 = vsel %vm112, 1, 0
    %v129 = vsel %vm113, 1, 0
    %v130 = vsel %vm114, 1, 0
    %v131 = vsel %vm115, 1, 0
    %v132 = vsel %vm116, 1, 0
    %v133 = vsel %vm117, 1, 0
    %v134 = vsel %vm118, 1, 0
    %v135 = vsel %vm119, 1, 0
    %v136 = vsel %vm120, 1, 0
    %v137 = vcvt.s32.f32 %v121
    %v138 = vcvt.s32.f32 %v122
    %v139 = vcvt.s32.f32 %v123
    %v140 = vcvt.s32.f32 %v124
    %v141 = vcvt.s32.f32 %v125
    %v142 = vcvt.s32.f32 %v126
    %v143 = vcvt.s32.f32 %v127
    %v144 = vcvt.s32.f32 %v128
    %v145 = vcvt.s32.f32 %v129
    %v146 = vcvt.s32.f32 %v130
    %v147 = vcvt.s32.f32 %v131
    %v148 = vcvt.s32.f32 %v132
    %v149 = vcvt.s32.f32 %v133
    %v150 = vcvt.s32.f32 %v134
    %v151 = vcvt.s32.f32 %v135
    %v152 = vcvt.s32.f32 %v136
    %v153 = vpack.c.bf16 %v138, %v137
    %v154 = vpack.c.bf16 %v140, %v139
    %v155 = vpack.c.bf16 %v142, %v141
    %v156 = vpack.c.bf16 %v144, %v143
    %v157 = vpack.c.bf16 %v146, %v145
    %v158 = vpack.c.bf16 %v148, %v147
    %v159 = vpack.c.bf16 %v150, %v149
    %v160 = vpack.c.bf16 %v152, %v151
    %161 = vset.pattern.permute.xlu0 1
    %162 = vperm.xlu0 %161, %v39
    %v163 = vpop.permute.xlu0 %162
    %164 = vset.pattern.permute.xlu0 1
    %165 = vperm.xlu0 %164, %v40
    %v166 = vpop.permute.xlu0 %165
    %167 = vset.pattern.permute.xlu0 1
    %168 = vperm.xlu0 %167, %v41
    %v169 = vpop.permute.xlu0 %168
    %170 = vset.pattern.permute.xlu0 1
    %171 = vperm.xlu0 %170, %v42
    %v172 = vpop.permute.xlu0 %171
    %173 = vset.pattern.permute.xlu0 1
    %174 = vperm.xlu0 %173, %v43
    %v175 = vpop.permute.xlu0 %174
    %176 = vset.pattern.permute.xlu0 1
    %177 = vperm.xlu0 %176, %v44
    %v178 = vpop.permute.xlu0 %177
    %179 = vset.pattern.permute.xlu0 1
    %180 = vperm.xlu0 %179, %v45
    %v181 = vpop.permute.xlu0 %180
    %182 = vset.pattern.permute.xlu0 1
    %183 = vperm.xlu0 %182, %v46
    %v184 = vpop.permute.xlu0 %183
    %185 = vset.pattern.permute.xlu0 1
    %186 = vperm.xlu0 %185, %v47
    %v187 = vpop.permute.xlu0 %186
    %188 = vset.pattern.permute.xlu0 1
    %189 = vperm.xlu0 %188, %v48
    %v190 = vpop.permute.xlu0 %189
    %191 = vset.pattern.permute.xlu0 1
    %192 = vperm.xlu0 %191, %v49
    %v193 = vpop.permute.xlu0 %192
    %194 = vset.pattern.permute.xlu0 1
    %195 = vperm.xlu0 %194, %v50
    %v196 = vpop.permute.xlu0 %195
    %197 = vset.pattern.permute.xlu0 1
    %198 = vperm.xlu0 %197, %v51
    %v199 = vpop.permute.xlu0 %198
    %200 = vset.pattern.permute.xlu0 1
    %201 = vperm.xlu0 %200, %v52
    %v202 = vpop.permute.xlu0 %201
    %203 = vset.pattern.permute.xlu0 1
    %204 = vperm.xlu0 %203, %v53
    %v205 = vpop.permute.xlu0 %204
    %206 = vset.pattern.permute.xlu0 1
    %207 = vperm.xlu0 %206, %v54
    %v208 = vpop.permute.xlu0 %207
    %vm209 = vcmp.eq.s32.totalorder %v56, %v163
    %vm210 = vcmp.eq.s32.totalorder %v56, %v166
    %vm211 = vcmp.eq.s32.totalorder %v56, %v169
    %vm212 = vcmp.eq.s32.totalorder %v56, %v172
    %vm213 = vcmp.eq.s32.totalorder %v56, %v175
    %vm214 = vcmp.eq.s32.totalorder %v56, %v178
    %vm215 = vcmp.eq.s32.totalorder %v56, %v181
    %vm216 = vcmp.eq.s32.totalorder %v56, %v184
    %vm217 = vcmp.eq.s32.totalorder %v56, %v187
    %vm218 = vcmp.eq.s32.totalorder %v56, %v190
    %vm219 = vcmp.eq.s32.totalorder %v56, %v193
    %vm220 = vcmp.eq.s32.totalorder %v56, %v196
    %vm221 = vcmp.eq.s32.totalorder %v56, %v199
    %vm222 = vcmp.eq.s32.totalorder %v56, %v202
    %vm223 = vcmp.eq.s32.totalorder %v56, %v205
    %vm224 = vcmp.eq.s32.totalorder %v56, %v208
    %v225 = vsel %vm209, 1, 0
    %v226 = vsel %vm210, 1, 0
    %v227 = vsel %vm211, 1, 0
    %v228 = vsel %vm212, 1, 0
    %v229 = vsel %vm213, 1, 0
    %v230 = vsel %vm214, 1, 0
    %v231 = vsel %vm215, 1, 0
    %v232 = vsel %vm216, 1, 0
    %v233 = vsel %vm217, 1, 0
    %v234 = vsel %vm218, 1, 0
    %v235 = vsel %vm219, 1, 0
    %v236 = vsel %vm220, 1, 0
    %v237 = vsel %vm221, 1, 0
    %v238 = vsel %vm222, 1, 0
    %v239 = vsel %vm223, 1, 0
    %v240 = vsel %vm224, 1, 0
    %v241 = vcvt.s32.f32 %v225
    %v242 = vcvt.s32.f32 %v226
    %v243 = vcvt.s32.f32 %v227
    %v244 = vcvt.s32.f32 %v228
    %v245 = vcvt.s32.f32 %v229
    %v246 = vcvt.s32.f32 %v230
    %v247 = vcvt.s32.f32 %v231
    %v248 = vcvt.s32.f32 %v232
    %v249 = vcvt.s32.f32 %v233
    %v250 = vcvt.s32.f32 %v234
    %v251 = vcvt.s32.f32 %v235
    %v252 = vcvt.s32.f32 %v236
    %v253 = vcvt.s32.f32 %v237
    %v254 = vcvt.s32.f32 %v238
    %v255 = vcvt.s32.f32 %v239
    %v256 = vcvt.s32.f32 %v240
    %v257 = vpack.c.bf16 %v242, %v241
    %v258 = vpack.c.bf16 %v244, %v243
    %v259 = vpack.c.bf16 %v246, %v245
    %v260 = vpack.c.bf16 %v248, %v247
    %v261 = vpack.c.bf16 %v250, %v249
    %v262 = vpack.c.bf16 %v252, %v251
    %v263 = vpack.c.bf16 %v254, %v253
    %v264 = vpack.c.bf16 %v256, %v255
    %265 = vset.pattern.permute.xlu0 3
    %266 = vperm.xlu0 %265, %v39
    %v267 = vpop.permute.xlu0 %266
    %268 = vset.pattern.permute.xlu0 3
    %269 = vperm.xlu0 %268, %v40
    %v270 = vpop.permute.xlu0 %269
    %271 = vset.pattern.permute.xlu0 3
    %272 = vperm.xlu0 %271, %v41
    %v273 = vpop.permute.xlu0 %272
    %274 = vset.pattern.permute.xlu0 3
    %275 = vperm.xlu0 %274, %v42
    %v276 = vpop.permute.xlu0 %275
    %277 = vset.pattern.permute.xlu0 3
    %278 = vperm.xlu0 %277, %v43
    %v279 = vpop.permute.xlu0 %278
    %280 = vset.pattern.permute.xlu0 3
    %281 = vperm.xlu0 %280, %v44
    %v282 = vpop.permute.xlu0 %281
    %283 = vset.pattern.permute.xlu0 3
    %284 = vperm.xlu0 %283, %v45
    %v285 = vpop.permute.xlu0 %284
    %286 = vset.pattern.permute.xlu0 3
    %287 = vperm.xlu0 %286, %v46
    %v288 = vpop.permute.xlu0 %287
    %289 = vset.pattern.permute.xlu0 3
    %290 = vperm.xlu0 %289, %v47
    %v291 = vpop.permute.xlu0 %290
    %292 = vset.pattern.permute.xlu0 3
    %293 = vperm.xlu0 %292, %v48
    %v294 = vpop.permute.xlu0 %293
    %295 = vset.pattern.permute.xlu0 3
    %296 = vperm.xlu0 %295, %v49
    %v297 = vpop.permute.xlu0 %296
    %298 = vset.pattern.permute.xlu0 3
    %299 = vperm.xlu0 %298, %v50
    %v300 = vpop.permute.xlu0 %299
    %301 = vset.pattern.permute.xlu0 3
    %302 = vperm.xlu0 %301, %v51
    %v303 = vpop.permute.xlu0 %302
    %304 = vset.pattern.permute.xlu0 3
    %305 = vperm.xlu0 %304, %v52
    %v306 = vpop.permute.xlu0 %305
    %307 = vset.pattern.permute.xlu0 3
    %308 = vperm.xlu0 %307, %v53
    %v309 = vpop.permute.xlu0 %308
    %310 = vset.pattern.permute.xlu0 3
    %311 = vperm.xlu0 %310, %v54
    %v312 = vpop.permute.xlu0 %311
    %vm313 = vcmp.eq.s32.totalorder %v56, %v267
    %vm314 = vcmp.eq.s32.totalorder %v56, %v270
    %vm315 = vcmp.eq.s32.totalorder %v56, %v273
    %vm316 = vcmp.eq.s32.totalorder %v56, %v276
    %vm317 = vcmp.eq.s32.totalorder %v56, %v279
    %vm318 = vcmp.eq.s32.totalorder %v56, %v282
    %vm319 = vcmp.eq.s32.totalorder %v56, %v285
    %vm320 = vcmp.eq.s32.totalorder %v56, %v288
    %vm321 = vcmp.eq.s32.totalorder %v56, %v291
    %vm322 = vcmp.eq.s32.totalorder %v56, %v294
    %vm323 = vcmp.eq.s32.totalorder %v56, %v297
    %vm324 = vcmp.eq.s32.totalorder %v56, %v300
    %vm325 = vcmp.eq.s32.totalorder %v56, %v303
    %vm326 = vcmp.eq.s32.totalorder %v56, %v306
    %vm327 = vcmp.eq.s32.totalorder %v56, %v309
    %vm328 = vcmp.eq.s32.totalorder %v56, %v312
    %v329 = vsel %vm313, 1, 0
    %v330 = vsel %vm314, 1, 0
    %v331 = vsel %vm315, 1, 0
    %v332 = vsel %vm316, 1, 0
    %v333 = vsel %vm317, 1, 0
    %v334 = vsel %vm318, 1, 0
    %v335 = vsel %vm319, 1, 0
    %v336 = vsel %vm320, 1, 0
    %v337 = vsel %vm321, 1, 0
    %v338 = vsel %vm322, 1, 0
    %v339 = vsel %vm323, 1, 0
    %v340 = vsel %vm324, 1, 0
    %v341 = vsel %vm325, 1, 0
    %v342 = vsel %vm326, 1, 0
    %v343 = vsel %vm327, 1, 0
    %v344 = vsel %vm328, 1, 0
    %v345 = vcvt.s32.f32 %v329
    %v346 = vcvt.s32.f32 %v330
    %v347 = vcvt.s32.f32 %v331
    %v348 = vcvt.s32.f32 %v332
    %v349 = vcvt.s32.f32 %v333
    %v350 = vcvt.s32.f32 %v334
    %v351 = vcvt.s32.f32 %v335
    %v352 = vcvt.s32.f32 %v336
    %v353 = vcvt.s32.f32 %v337
    %v354 = vcvt.s32.f32 %v338
    %v355 = vcvt.s32.f32 %v339
    %v356 = vcvt.s32.f32 %v340
    %v357 = vcvt.s32.f32 %v341
    %v358 = vcvt.s32.f32 %v342
    %v359 = vcvt.s32.f32 %v343
    %v360 = vcvt.s32.f32 %v344
    %v361 = vpack.c.bf16 %v346, %v345
    %v362 = vpack.c.bf16 %v348, %v347
    %v363 = vpack.c.bf16 %v350, %v349
    %v364 = vpack.c.bf16 %v352, %v351
    %v365 = vpack.c.bf16 %v354, %v353
    %v366 = vpack.c.bf16 %v356, %v355
    %v367 = vpack.c.bf16 %v358, %v357
    %v368 = vpack.c.bf16 %v360, %v359
    %v369 = vadd.bf16 %v257, %v361
    %v370 = vadd.bf16 %v258, %v362
    %v371 = vadd.bf16 %v259, %v363
    %v372 = vadd.bf16 %v260, %v364
    %v373 = vadd.bf16 %v261, %v365
    %v374 = vadd.bf16 %v262, %v366
    %v375 = vadd.bf16 %v263, %v367
    %v376 = vadd.bf16 %v264, %v368
    %377 = vset.pattern.permute.xlu0 2
    %378 = vperm.xlu0 %377, %v39
    %v379 = vpop.permute.xlu0 %378
    %380 = vset.pattern.permute.xlu0 2
    %381 = vperm.xlu0 %380, %v40
    %v382 = vpop.permute.xlu0 %381
    %383 = vset.pattern.permute.xlu0 2
    %384 = vperm.xlu0 %383, %v41
    %v385 = vpop.permute.xlu0 %384
    %386 = vset.pattern.permute.xlu0 2
    %387 = vperm.xlu0 %386, %v42
    %v388 = vpop.permute.xlu0 %387
    %389 = vset.pattern.permute.xlu0 2
    %390 = vperm.xlu0 %389, %v43
    %v391 = vpop.permute.xlu0 %390
    %392 = vset.pattern.permute.xlu0 2
    %393 = vperm.xlu0 %392, %v44
    %v394 = vpop.permute.xlu0 %393
    %395 = vset.pattern.permute.xlu0 2
    %396 = vperm.xlu0 %395, %v45
    %v397 = vpop.permute.xlu0 %396
    %398 = vset.pattern.permute.xlu0 2
    %399 = vperm.xlu0 %398, %v46
    %v400 = vpop.permute.xlu0 %399
    %401 = vset.pattern.permute.xlu0 2
    %402 = vperm.xlu0 %401, %v47
    %v403 = vpop.permute.xlu0 %402
    %404 = vset.pattern.permute.xlu0 2
    %405 = vperm.xlu0 %404, %v48
    %v406 = vpop.permute.xlu0 %405
    %407 = vset.pattern.permute.xlu0 2
    %408 = vperm.xlu0 %407, %v49
    %v409 = vpop.permute.xlu0 %408
    %410 = vset.pattern.permute.xlu0 2
    %411 = vperm.xlu0 %410, %v50
    %v412 = vpop.permute.xlu0 %411
    %413 = vset.pattern.permute.xlu0 2
    %414 = vperm.xlu0 %413, %v51
    %v415 = vpop.permute.xlu0 %414
    %416 = vset.pattern.permute.xlu0 2
    %417 = vperm.xlu0 %416, %v52
    %v418 = vpop.permute.xlu0 %417
    %419 = vset.pattern.permute.xlu0 2
    %420 = vperm.xlu0 %419, %v53
    %v421 = vpop.permute.xlu0 %420
    %422 = vset.pattern.permute.xlu0 2
    %423 = vperm.xlu0 %422, %v54
    %v424 = vpop.permute.xlu0 %423
    %vm425 = vcmp.eq.s32.totalorder %v56, %v379
    %vm426 = vcmp.eq.s32.totalorder %v56, %v382
    %vm427 = vcmp.eq.s32.totalorder %v56, %v385
    %vm428 = vcmp.eq.s32.totalorder %v56, %v388
    %vm429 = vcmp.eq.s32.totalorder %v56, %v391
    %vm430 = vcmp.eq.s32.totalorder %v56, %v394
    %vm431 = vcmp.eq.s32.totalorder %v56, %v397
    %vm432 = vcmp.eq.s32.totalorder %v56, %v400
    %vm433 = vcmp.eq.s32.totalorder %v56, %v403
    %vm434 = vcmp.eq.s32.totalorder %v56, %v406
    %vm435 = vcmp.eq.s32.totalorder %v56, %v409
    %vm436 = vcmp.eq.s32.totalorder %v56, %v412
    %vm437 = vcmp.eq.s32.totalorder %v56, %v415
    %vm438 = vcmp.eq.s32.totalorder %v56, %v418
    %vm439 = vcmp.eq.s32.totalorder %v56, %v421
    %vm440 = vcmp.eq.s32.totalorder %v56, %v424
    %v441 = vsel %vm425, 1, 0
    %v442 = vsel %vm426, 1, 0
    %v443 = vsel %vm427, 1, 0
    %v444 = vsel %vm428, 1, 0
    %v445 = vsel %vm429, 1, 0
    %v446 = vsel %vm430, 1, 0
    %v447 = vsel %vm431, 1, 0
    %v448 = vsel %vm432, 1, 0
    %v449 = vsel %vm433, 1, 0
    %v450 = vsel %vm434, 1, 0
    %v451 = vsel %vm435, 1, 0
    %v452 = vsel %vm436, 1, 0
    %v453 = vsel %vm437, 1, 0
    %v454 = vsel %vm438, 1, 0
    %v455 = vsel %vm439, 1, 0
    %v456 = vsel %vm440, 1, 0
    %v457 = vcvt.s32.f32 %v441
    %v458 = vcvt.s32.f32 %v442
    %v459 = vcvt.s32.f32 %v443
    %v460 = vcvt.s32.f32 %v444
    %v461 = vcvt.s32.f32 %v445
    %v462 = vcvt.s32.f32 %v446
    %v463 = vcvt.s32.f32 %v447
    %v464 = vcvt.s32.f32 %v448
    %v465 = vcvt.s32.f32 %v449
    %v466 = vcvt.s32.f32 %v450
    %v467 = vcvt.s32.f32 %v451
    %v468 = vcvt.s32.f32 %v452
    %v469 = vcvt.s32.f32 %v453
    %v470 = vcvt.s32.f32 %v454
    %v471 = vcvt.s32.f32 %v455
    %v472 = vcvt.s32.f32 %v456
    %v473 = vpack.c.bf16 %v458, %v457
    %v474 = vpack.c.bf16 %v460, %v459
    %v475 = vpack.c.bf16 %v462, %v461
    %v476 = vpack.c.bf16 %v464, %v463
    %v477 = vpack.c.bf16 %v466, %v465
    %v478 = vpack.c.bf16 %v468, %v467
    %v479 = vpack.c.bf16 %v470, %v469
    %v480 = vpack.c.bf16 %v472, %v471
    %481 = vset.pattern.permute.xlu0 4
    %482 = vperm.xlu0 %481, %v39
    %v483 = vpop.permute.xlu0 %482
    %484 = vset.pattern.permute.xlu0 4
    %485 = vperm.xlu0 %484, %v40
    %v486 = vpop.permute.xlu0 %485
    %487 = vset.pattern.permute.xlu0 4
    %488 = vperm.xlu0 %487, %v41
    %v489 = vpop.permute.xlu0 %488
    %490 = vset.pattern.permute.xlu0 4
    %491 = vperm.xlu0 %490, %v42
    %v492 = vpop.permute.xlu0 %491
    %493 = vset.pattern.permute.xlu0 4
    %494 = vperm.xlu0 %493, %v43
    %v495 = vpop.permute.xlu0 %494
    %496 = vset.pattern.permute.xlu0 4
    %497 = vperm.xlu0 %496, %v44
    %v498 = vpop.permute.xlu0 %497
    %499 = vset.pattern.permute.xlu0 4
    %500 = vperm.xlu0 %499, %v45
    %v501 = vpop.permute.xlu0 %500
    %502 = vset.pattern.permute.xlu0 4
    %503 = vperm.xlu0 %502, %v46
    %v504 = vpop.permute.xlu0 %503
    %505 = vset.pattern.permute.xlu0 4
    %506 = vperm.xlu0 %505, %v47
    %v507 = vpop.permute.xlu0 %506
    %508 = vset.pattern.permute.xlu0 4
    %509 = vperm.xlu0 %508, %v48
    %v510 = vpop.permute.xlu0 %509
    %511 = vset.pattern.permute.xlu0 4
    %512 = vperm.xlu0 %511, %v49
    %v513 = vpop.permute.xlu0 %512
    %514 = vset.pattern.permute.xlu0 4
    %515 = vperm.xlu0 %514, %v50
    %v516 = vpop.permute.xlu0 %515
    %517 = vset.pattern.permute.xlu0 4
    %518 = vperm.xlu0 %517, %v51
    %v519 = vpop.permute.xlu0 %518
    %520 = vset.pattern.permute.xlu0 4
    %521 = vperm.xlu0 %520, %v52
    %v522 = vpop.permute.xlu0 %521
    %523 = vset.pattern.permute.xlu0 4
    %524 = vperm.xlu0 %523, %v53
    %v525 = vpop.permute.xlu0 %524
    %526 = vset.pattern.permute.xlu0 4
    %527 = vperm.xlu0 %526, %v54
    %v528 = vpop.permute.xlu0 %527
    %vm529 = vcmp.eq.s32.totalorder %v56, %v483
    %vm530 = vcmp.eq.s32.totalorder %v56, %v486
    %vm531 = vcmp.eq.s32.totalorder %v56, %v489
    %vm532 = vcmp.eq.s32.totalorder %v56, %v492
    %vm533 = vcmp.eq.s32.totalorder %v56, %v495
    %vm534 = vcmp.eq.s32.totalorder %v56, %v498
    %vm535 = vcmp.eq.s32.totalorder %v56, %v501
    %vm536 = vcmp.eq.s32.totalorder %v56, %v504
    %vm537 = vcmp.eq.s32.totalorder %v56, %v507
    %vm538 = vcmp.eq.s32.totalorder %v56, %v510
    %vm539 = vcmp.eq.s32.totalorder %v56, %v513
    %vm540 = vcmp.eq.s32.totalorder %v56, %v516
    %vm541 = vcmp.eq.s32.totalorder %v56, %v519
    %vm542 = vcmp.eq.s32.totalorder %v56, %v522
    %vm543 = vcmp.eq.s32.totalorder %v56, %v525
    %vm544 = vcmp.eq.s32.totalorder %v56, %v528
    %v545 = vsel %vm529, 1, 0
    %v546 = vsel %vm530, 1, 0
    %v547 = vsel %vm531, 1, 0
    %v548 = vsel %vm532, 1, 0
    %v549 = vsel %vm533, 1, 0
    %v550 = vsel %vm534, 1, 0
    %v551 = vsel %vm535, 1, 0
    %v552 = vsel %vm536, 1, 0
    %v553 = vsel %vm537, 1, 0
    %v554 = vsel %vm538, 1, 0
    %v555 = vsel %vm539, 1, 0
    %v556 = vsel %vm540, 1, 0
    %v557 = vsel %vm541, 1, 0
    %v558 = vsel %vm542, 1, 0
    %v559 = vsel %vm543, 1, 0
    %v560 = vsel %vm544, 1, 0
    %v561 = vcvt.s32.f32 %v545
    %v562 = vcvt.s32.f32 %v546
    %v563 = vcvt.s32.f32 %v547
    %v564 = vcvt.s32.f32 %v548
    %v565 = vcvt.s32.f32 %v549
    %v566 = vcvt.s32.f32 %v550
    %v567 = vcvt.s32.f32 %v551
    %v568 = vcvt.s32.f32 %v552
    %v569 = vcvt.s32.f32 %v553
    %v570 = vcvt.s32.f32 %v554
    %v571 = vcvt.s32.f32 %v555
    %v572 = vcvt.s32.f32 %v556
    %v573 = vcvt.s32.f32 %v557
    %v574 = vcvt.s32.f32 %v558
    %v575 = vcvt.s32.f32 %v559
    %v576 = vcvt.s32.f32 %v560
    %v577 = vpack.c.bf16 %v562, %v561
    %v578 = vpack.c.bf16 %v564, %v563
    %v579 = vpack.c.bf16 %v566, %v565
    %v580 = vpack.c.bf16 %v568, %v567
    %v581 = vpack.c.bf16 %v570, %v569
    %v582 = vpack.c.bf16 %v572, %v571
    %v583 = vpack.c.bf16 %v574, %v573
    %v584 = vpack.c.bf16 %v576, %v575
    %v585 = vadd.bf16 %v473, %v577
    %v586 = vadd.bf16 %v474, %v578
    %v587 = vadd.bf16 %v475, %v579
    %v588 = vadd.bf16 %v476, %v580
    %v589 = vadd.bf16 %v477, %v581
    %v590 = vadd.bf16 %v478, %v582
    %v591 = vadd.bf16 %v479, %v583
    %v592 = vadd.bf16 %v480, %v584
    %593 = vset.pattern.permute.xlu0 5
    %594 = vperm.xlu0 %593, %v39
    %v595 = vpop.permute.xlu0 %594
    %596 = vset.pattern.permute.xlu0 5
    %597 = vperm.xlu0 %596, %v40
    %v598 = vpop.permute.xlu0 %597
    %599 = vset.pattern.permute.xlu0 5
    %600 = vperm.xlu0 %599, %v41
    %v601 = vpop.permute.xlu0 %600
    %602 = vset.pattern.permute.xlu0 5
    %603 = vperm.xlu0 %602, %v42
    %v604 = vpop.permute.xlu0 %603
    %605 = vset.pattern.permute.xlu0 5
    %606 = vperm.xlu0 %605, %v43
    %v607 = vpop.permute.xlu0 %606
    %608 = vset.pattern.permute.xlu0 5
    %609 = vperm.xlu0 %608, %v44
    %v610 = vpop.permute.xlu0 %609
    %611 = vset.pattern.permute.xlu0 5
    %612 = vperm.xlu0 %611, %v45
    %v613 = vpop.permute.xlu0 %612
    %614 = vset.pattern.permute.xlu0 5
    %615 = vperm.xlu0 %614, %v46
    %v616 = vpop.permute.xlu0 %615
    %617 = vset.pattern.permute.xlu0 5
    %618 = vperm.xlu0 %617, %v47
    %v619 = vpop.permute.xlu0 %618
    %620 = vset.pattern.permute.xlu0 5
    %621 = vperm.xlu0 %620, %v48
    %v622 = vpop.permute.xlu0 %621
    %623 = vset.pattern.permute.xlu0 5
    %624 = vperm.xlu0 %623, %v49
    %v625 = vpop.permute.xlu0 %624
    %626 = vset.pattern.permute.xlu0 5
    %627 = vperm.xlu0 %626, %v50
    %v628 = vpop.permute.xlu0 %627
    %629 = vset.pattern.permute.xlu0 5
    %630 = vperm.xlu0 %629, %v51
    %v631 = vpop.permute.xlu0 %630
    %632 = vset.pattern.permute.xlu0 5
    %633 = vperm.xlu0 %632, %v52
    %v634 = vpop.permute.xlu0 %633
    %635 = vset.pattern.permute.xlu0 5
    %636 = vperm.xlu0 %635, %v53
    %v637 = vpop.permute.xlu0 %636
    %638 = vset.pattern.permute.xlu0 5
    %639 = vperm.xlu0 %638, %v54
    %v640 = vpop.permute.xlu0 %639
    %vm641 = vcmp.eq.s32.totalorder %v56, %v595
    %vm642 = vcmp.eq.s32.totalorder %v56, %v598
    %vm643 = vcmp.eq.s32.totalorder %v56, %v601
    %vm644 = vcmp.eq.s32.totalorder %v56, %v604
    %vm645 = vcmp.eq.s32.totalorder %v56, %v607
    %vm646 = vcmp.eq.s32.totalorder %v56, %v610
    %vm647 = vcmp.eq.s32.totalorder %v56, %v613
    %vm648 = vcmp.eq.s32.totalorder %v56, %v616
    %vm649 = vcmp.eq.s32.totalorder %v56, %v619
    %vm650 = vcmp.eq.s32.totalorder %v56, %v622
    %vm651 = vcmp.eq.s32.totalorder %v56, %v625
    %vm652 = vcmp.eq.s32.totalorder %v56, %v628
    %vm653 = vcmp.eq.s32.totalorder %v56, %v631
    %vm654 = vcmp.eq.s32.totalorder %v56, %v634
    %vm655 = vcmp.eq.s32.totalorder %v56, %v637
    %vm656 = vcmp.eq.s32.totalorder %v56, %v640
    %v657 = vsel %vm641, 1, 0
    %v658 = vsel %vm642, 1, 0
    %v659 = vsel %vm643, 1, 0
    %v660 = vsel %vm644, 1, 0
    %v661 = vsel %vm645, 1, 0
    %v662 = vsel %vm646, 1, 0
    %v663 = vsel %vm647, 1, 0
    %v664 = vsel %vm648, 1, 0
    %v665 = vsel %vm649, 1, 0
    %v666 = vsel %vm650, 1, 0
    %v667 = vsel %vm651, 1, 0
    %v668 = vsel %vm652, 1, 0
    %v669 = vsel %vm653, 1, 0
    %v670 = vsel %vm654, 1, 0
    %v671 = vsel %vm655, 1, 0
    %v672 = vsel %vm656, 1, 0
    %v673 = vcvt.s32.f32 %v657
    %v674 = vcvt.s32.f32 %v658
    %v675 = vcvt.s32.f32 %v659
    %v676 = vcvt.s32.f32 %v660
    %v677 = vcvt.s32.f32 %v661
    %v678 = vcvt.s32.f32 %v662
    %v679 = vcvt.s32.f32 %v663
    %v680 = vcvt.s32.f32 %v664
    %v681 = vcvt.s32.f32 %v665
    %v682 = vcvt.s32.f32 %v666
    %v683 = vcvt.s32.f32 %v667
    %v684 = vcvt.s32.f32 %v668
    %v685 = vcvt.s32.f32 %v669
    %v686 = vcvt.s32.f32 %v670
    %v687 = vcvt.s32.f32 %v671
    %v688 = vcvt.s32.f32 %v672
    %v689 = vpack.c.bf16 %v674, %v673
    %v690 = vpack.c.bf16 %v676, %v675
    %v691 = vpack.c.bf16 %v678, %v677
    %v692 = vpack.c.bf16 %v680, %v679
    %v693 = vpack.c.bf16 %v682, %v681
    %v694 = vpack.c.bf16 %v684, %v683
    %v695 = vpack.c.bf16 %v686, %v685
    %v696 = vpack.c.bf16 %v688, %v687
    %697 = vset.pattern.permute.xlu0 6
    %698 = vperm.xlu0 %697, %v39
    %v699 = vpop.permute.xlu0 %698
    %700 = vset.pattern.permute.xlu0 6
    %701 = vperm.xlu0 %700, %v40
    %v702 = vpop.permute.xlu0 %701
    %703 = vset.pattern.permute.xlu0 6
    %704 = vperm.xlu0 %703, %v41
    %v705 = vpop.permute.xlu0 %704
    %706 = vset.pattern.permute.xlu0 6
    %707 = vperm.xlu0 %706, %v42
    %v708 = vpop.permute.xlu0 %707
    %709 = vset.pattern.permute.xlu0 6
    %710 = vperm.xlu0 %709, %v43
    %v711 = vpop.permute.xlu0 %710
    %712 = vset.pattern.permute.xlu0 6
    %713 = vperm.xlu0 %712, %v44
    %v714 = vpop.permute.xlu0 %713
    %715 = vset.pattern.permute.xlu0 6
    %716 = vperm.xlu0 %715, %v45
    %v717 = vpop.permute.xlu0 %716
    %718 = vset.pattern.permute.xlu0 6
    %719 = vperm.xlu0 %718, %v46
    %v720 = vpop.permute.xlu0 %719
    %721 = vset.pattern.permute.xlu0 6
    %722 = vperm.xlu0 %721, %v47
    %v723 = vpop.permute.xlu0 %722
    %724 = vset.pattern.permute.xlu0 6
    %725 = vperm.xlu0 %724, %v48
    %v726 = vpop.permute.xlu0 %725
    %727 = vset.pattern.permute.xlu0 6
    %728 = vperm.xlu0 %727, %v49
    %v729 = vpop.permute.xlu0 %728
    %730 = vset.pattern.permute.xlu0 6
    %731 = vperm.xlu0 %730, %v50
    %v732 = vpop.permute.xlu0 %731
    %733 = vset.pattern.permute.xlu0 6
    %734 = vperm.xlu0 %733, %v51
    %v735 = vpop.permute.xlu0 %734
    %736 = vset.pattern.permute.xlu0 6
    %737 = vperm.xlu0 %736, %v52
    %v738 = vpop.permute.xlu0 %737
    %739 = vset.pattern.permute.xlu0 6
    %740 = vperm.xlu0 %739, %v53
    %v741 = vpop.permute.xlu0 %740
    %742 = vset.pattern.permute.xlu0 6
    %743 = vperm.xlu0 %742, %v54
    %v744 = vpop.permute.xlu0 %743
    %vm745 = vcmp.eq.s32.totalorder %v56, %v699
    %vm746 = vcmp.eq.s32.totalorder %v56, %v702
    %vm747 = vcmp.eq.s32.totalorder %v56, %v705
    %vm748 = vcmp.eq.s32.totalorder %v56, %v708
    %vm749 = vcmp.eq.s32.totalorder %v56, %v711
    %vm750 = vcmp.eq.s32.totalorder %v56, %v714
    %vm751 = vcmp.eq.s32.totalorder %v56, %v717
    %vm752 = vcmp.eq.s32.totalorder %v56, %v720
    %vm753 = vcmp.eq.s32.totalorder %v56, %v723
    %vm754 = vcmp.eq.s32.totalorder %v56, %v726
    %vm755 = vcmp.eq.s32.totalorder %v56, %v729
    %vm756 = vcmp.eq.s32.totalorder %v56, %v732
    %vm757 = vcmp.eq.s32.totalorder %v56, %v735
    %vm758 = vcmp.eq.s32.totalorder %v56, %v738
    %vm759 = vcmp.eq.s32.totalorder %v56, %v741
    %vm760 = vcmp.eq.s32.totalorder %v56, %v744
    %v761 = vsel %vm745, 1, 0
    %v762 = vsel %vm746, 1, 0
    %v763 = vsel %vm747, 1, 0
    %v764 = vsel %vm748, 1, 0
    %v765 = vsel %vm749, 1, 0
    %v766 = vsel %vm750, 1, 0
    %v767 = vsel %vm751, 1, 0
    %v768 = vsel %vm752, 1, 0
    %v769 = vsel %vm753, 1, 0
    %v770 = vsel %vm754, 1, 0
    %v771 = vsel %vm755, 1, 0
    %v772 = vsel %vm756, 1, 0
    %v773 = vsel %vm757, 1, 0
    %v774 = vsel %vm758, 1, 0
    %v775 = vsel %vm759, 1, 0
    %v776 = vsel %vm760, 1, 0
    %v777 = vcvt.s32.f32 %v761
    %v778 = vcvt.s32.f32 %v762
    %v779 = vcvt.s32.f32 %v763
    %v780 = vcvt.s32.f32 %v764
    %v781 = vcvt.s32.f32 %v765
    %v782 = vcvt.s32.f32 %v766
    %v783 = vcvt.s32.f32 %v767
    %v784 = vcvt.s32.f32 %v768
    %v785 = vcvt.s32.f32 %v769
    %v786 = vcvt.s32.f32 %v770
    %v787 = vcvt.s32.f32 %v771
    %v788 = vcvt.s32.f32 %v772
    %v789 = vcvt.s32.f32 %v773
    %v790 = vcvt.s32.f32 %v774
    %v791 = vcvt.s32.f32 %v775
    %v792 = vcvt.s32.f32 %v776
    %v793 = vpack.c.bf16 %v778, %v777
    %v794 = vpack.c.bf16 %v780, %v779
    %v795 = vpack.c.bf16 %v782, %v781
    %v796 = vpack.c.bf16 %v784, %v783
    %v797 = vpack.c.bf16 %v786, %v785
    %v798 = vpack.c.bf16 %v788, %v787
    %v799 = vpack.c.bf16 %v790, %v789
    %v800 = vpack.c.bf16 %v792, %v791
    %v801 = vld [vmem:[#allocation2] sm:$0xf]
    %v802 = vld [vmem:[#allocation2 + $0x4] sm:$0xf]
    %v803 = vld [vmem:[#allocation2 + $0x8] sm:$0xf]
    %v804 = vld [vmem:[#allocation2 + $0xc] sm:$0xf]
    %v805 = vld [vmem:[#allocation2 + $0x10] sm:$0xf]
    %v806 = vld [vmem:[#allocation2 + $0x14] sm:$0xf]
    %v807 = vld [vmem:[#allocation2 + $0x18] sm:$0xf]
    %v808 = vld [vmem:[#allocation2 + $0x1c] sm:$0xf]
    %v809 = vld [vmem:[#allocation2 + $0x20] sm:$0xf]
    %v810 = vld [vmem:[#allocation2 + $0x24] sm:$0xf]
    %v811 = vld [vmem:[#allocation2 + $0x28] sm:$0xf]
    %v812 = vld [vmem:[#allocation2 + $0x2c] sm:$0xf]
    %v813 = vld [vmem:[#allocation2 + $0x30] sm:$0xf]
    %v814 = vld [vmem:[#allocation2 + $0x34] sm:$0xf]
    %v815 = vld [vmem:[#allocation2 + $0x38] sm:$0xf]
    %v816 = vld [vmem:[#allocation2 + $0x3c] sm:$0xf]
    %v817 = vld [vmem:[#allocation2 + $0x40] sm:$0xf]
    %v818 = vld [vmem:[#allocation2 + $0x44] sm:$0xf]
    %v819 = vld [vmem:[#allocation2 + $0x48] sm:$0xf]
    %v820 = vld [vmem:[#allocation2 + $0x4c] sm:$0xf]
    %v821 = vld [vmem:[#allocation2 + $0x50] sm:$0xf]
    %v822 = vld [vmem:[#allocation2 + $0x54] sm:$0xf]
    %v823 = vld [vmem:[#allocation2 + $0x58] sm:$0xf]
    %v824 = vld [vmem:[#allocation2 + $0x5c] sm:$0xf]
    %v825 = vld [vmem:[#allocation2 + $0x60] sm:$0xf]
    %v826 = vld [vmem:[#allocation2 + $0x64] sm:$0xf]
    %v827 = vld [vmem:[#allocation2 + $0x68] sm:$0xf]
    %v828 = vld [vmem:[#allocation2 + $0x6c] sm:$0xf]
    %v829 = vld [vmem:[#allocation2 + $0x70] sm:$0xf]
    %v830 = vld [vmem:[#allocation2 + $0x74] sm:$0xf]
    %v831 = vld [vmem:[#allocation2 + $0x78] sm:$0xf]
    %v832 = vld [vmem:[#allocation2 + $0x7c] sm:$0xf]
    %v833 = vld [vmem:[#allocation2 + $0x80] sm:$0xf]
    %v834 = vld [vmem:[#allocation2 + $0x84] sm:$0xf]
    %v835 = vld [vmem:[#allocation2 + $0x88] sm:$0xf]
    %v836 = vld [vmem:[#allocation2 + $0x8c] sm:$0xf]
    %v837 = vld [vmem:[#allocation2 + $0x90] sm:$0xf]
    %v838 = vld [vmem:[#allocation2 + $0x94] sm:$0xf]
    %v839 = vld [vmem:[#allocation2 + $0x98] sm:$0xf]
    %v840 = vld [vmem:[#allocation2 + $0x9c] sm:$0xf]
    %v841 = vld [vmem:[#allocation2 + $0xa0] sm:$0xf]
    %v842 = vld [vmem:[#allocation2 + $0xa4] sm:$0xf]
    %v843 = vld [vmem:[#allocation2 + $0xa8] sm:$0xf]
    %v844 = vld [vmem:[#allocation2 + $0xac] sm:$0xf]
    %v845 = vld [vmem:[#allocation2 + $0xb0] sm:$0xf]
    %v846 = vld [vmem:[#allocation2 + $0xb4] sm:$0xf]
    %v847 = vld [vmem:[#allocation2 + $0xb8] sm:$0xf]
    %v848 = vld [vmem:[#allocation2 + $0xbc] sm:$0xf]
    %v849 = vld [vmem:[#allocation2 + $0xc0] sm:$0xf]
    %v850 = vld [vmem:[#allocation2 + $0xc4] sm:$0xf]
    %v851 = vld [vmem:[#allocation2 + $0xc8] sm:$0xf]
    %v852 = vld [vmem:[#allocation2 + $0xcc] sm:$0xf]
    %v853 = vld [vmem:[#allocation2 + $0xd0] sm:$0xf]
    %v854 = vld [vmem:[#allocation2 + $0xd4] sm:$0xf]
    %v855 = vld [vmem:[#allocation2 + $0xd8] sm:$0xf]
    %v856 = vld [vmem:[#allocation2 + $0xdc] sm:$0xf]
    %v857 = vld [vmem:[#allocation2 + $0xe0] sm:$0xf]
    %v858 = vld [vmem:[#allocation2 + $0xe4] sm:$0xf]
    %v859 = vld [vmem:[#allocation2 + $0xe8] sm:$0xf]
    %v860 = vld [vmem:[#allocation2 + $0xec] sm:$0xf]
    %v861 = vld [vmem:[#allocation2 + $0xf0] sm:$0xf]
    %v862 = vld [vmem:[#allocation2 + $0xf4] sm:$0xf]
    %v863 = vld [vmem:[#allocation2 + $0xf8] sm:$0xf]
    %v864 = vld [vmem:[#allocation2 + $0xfc] sm:$0xf]
    %v865 = vld [vmem:[#allocation2 + $0x100] sm:$0xf]
    %v866 = vld [vmem:[#allocation2 + $0x104] sm:$0xf]
    %v867 = vld [vmem:[#allocation2 + $0x108] sm:$0xf]
    %v868 = vld [vmem:[#allocation2 + $0x10c] sm:$0xf]
    %v869 = vld [vmem:[#allocation2 + $0x110] sm:$0xf]
    %v870 = vld [vmem:[#allocation2 + $0x114] sm:$0xf]
    %v871 = vld [vmem:[#allocation2 + $0x118] sm:$0xf]
    %v872 = vld [vmem:[#allocation2 + $0x11c] sm:$0xf]
    %v873 = vld [vmem:[#allocation2 + $0x120] sm:$0xf]
    %v874 = vld [vmem:[#allocation2 + $0x124] sm:$0xf]
    %v875 = vld [vmem:[#allocation2 + $0x128] sm:$0xf]
    %v876 = vld [vmem:[#allocation2 + $0x12c] sm:$0xf]
    %v877 = vld [vmem:[#allocation2 + $0x130] sm:$0xf]
    %v878 = vld [vmem:[#allocation2 + $0x134] sm:$0xf]
    %v879 = vld [vmem:[#allocation2 + $0x138] sm:$0xf]
    %v880 = vld [vmem:[#allocation2 + $0x13c] sm:$0xf]
    %v961 = vunpack.c.l.b16 %v801
    %v962 = vunpack.c.l.b16 %v802
    %v963 = vunpack.c.l.b16 %v803
    %v964 = vunpack.c.l.b16 %v804
    %v965 = vunpack.c.l.b16 %v805
    %v966 = vunpack.c.l.b16 %v806
    %v967 = vunpack.c.l.b16 %v807
    %v968 = vunpack.c.l.b16 %v808
    %v969 = vunpack.c.l.b16 %v809
    %v970 = vunpack.c.l.b16 %v810
    %v971 = vunpack.c.l.b16 %v811
    %v972 = vunpack.c.l.b16 %v812
    %v973 = vunpack.c.l.b16 %v813
    %v974 = vunpack.c.l.b16 %v814
    %v975 = vunpack.c.l.b16 %v815
    %v976 = vunpack.c.l.b16 %v816
    %v977 = vunpack.c.l.b16 %v817
    %v978 = vunpack.c.l.b16 %v818
    %v979 = vunpack.c.l.b16 %v819
    %v980 = vunpack.c.l.b16 %v820
    %v981 = vunpack.c.l.b16 %v821
    %v982 = vunpack.c.l.b16 %v822
    %v983 = vunpack.c.l.b16 %v823
    %v984 = vunpack.c.l.b16 %v824
    %v985 = vunpack.c.l.b16 %v825
    %v986 = vunpack.c.l.b16 %v826
    %v987 = vunpack.c.l.b16 %v827
    %v988 = vunpack.c.l.b16 %v828
    %v989 = vunpack.c.l.b16 %v829
    %v990 = vunpack.c.l.b16 %v830
    %v991 = vunpack.c.l.b16 %v831
    %v992 = vunpack.c.l.b16 %v832
    %v993 = vunpack.c.l.b16 %v833
    %v994 = vunpack.c.l.b16 %v834
    %v995 = vunpack.c.l.b16 %v835
    %v996 = vunpack.c.l.b16 %v836
    %v997 = vunpack.c.l.b16 %v837
    %v998 = vunpack.c.l.b16 %v838
    %v999 = vunpack.c.l.b16 %v839
    %v1000 = vunpack.c.l.b16 %v840
    %v1001 = vunpack.c.l.b16 %v841
    %v1002 = vunpack.c.l.b16 %v842
    %v1003 = vunpack.c.l.b16 %v843
    %v1004 = vunpack.c.l.b16 %v844
    %v1005 = vunpack.c.l.b16 %v845
    %v1006 = vunpack.c.l.b16 %v846
    %v1007 = vunpack.c.l.b16 %v847
    %v1008 = vunpack.c.l.b16 %v848
    %v1009 = vunpack.c.l.b16 %v849
    %v1010 = vunpack.c.l.b16 %v850
    %v1011 = vunpack.c.l.b16 %v851
    %v1012 = vunpack.c.l.b16 %v852
    %v1013 = vunpack.c.l.b16 %v853
    %v1014 = vunpack.c.l.b16 %v854
    %v1015 = vunpack.c.l.b16 %v855
    %v1016 = vunpack.c.l.b16 %v856
    %v1017 = vunpack.c.l.b16 %v857
    %v1018 = vunpack.c.l.b16 %v858
    %v1019 = vunpack.c.l.b16 %v859
    %v1020 = vunpack.c.l.b16 %v860
    %v1021 = vunpack.c.l.b16 %v861
    %v1022 = vunpack.c.l.b16 %v862
    %v1023 = vunpack.c.l.b16 %v863
    %v1024 = vunpack.c.l.b16 %v864
    %v1025 = vunpack.c.l.b16 %v865
    %v1026 = vunpack.c.l.b16 %v866
    %v1027 = vunpack.c.l.b16 %v867
    %v1028 = vunpack.c.l.b16 %v868
    %v1029 = vunpack.c.l.b16 %v869
    %v1030 = vunpack.c.l.b16 %v870
    %v1031 = vunpack.c.l.b16 %v871
    %v1032 = vunpack.c.l.b16 %v872
    %v1033 = vunpack.c.l.b16 %v873
    %v1034 = vunpack.c.l.b16 %v874
    %v1035 = vunpack.c.l.b16 %v875
    %v1036 = vunpack.c.l.b16 %v876
    %v1037 = vunpack.c.l.b16 %v877
    %v1038 = vunpack.c.l.b16 %v878
    %v1039 = vunpack.c.l.b16 %v879
    %v1040 = vunpack.c.l.b16 %v880
    %v1041 = vpack.c.b16 %v962, %v961
    %v1042 = vpack.c.b16 %v964, %v963
    %v1043 = vpack.c.b16 %v966, %v965
    %v1044 = vpack.c.b16 %v968, %v967
    %v1045 = vpack.c.b16 %v970, %v969
    %v1046 = vpack.c.b16 %v972, %v971
    %v1047 = vpack.c.b16 %v974, %v973
    %v1048 = vpack.c.b16 %v976, %v975
    %v1049 = vpack.c.b16 %v978, %v977
    %v1050 = vpack.c.b16 %v980, %v979
    %v1051 = vpack.c.b16 %v982, %v981
    %v1052 = vpack.c.b16 %v984, %v983
    %v1053 = vpack.c.b16 %v986, %v985
    %v1054 = vpack.c.b16 %v988, %v987
    %v1055 = vpack.c.b16 %v990, %v989
    %v1056 = vpack.c.b16 %v992, %v991
    %v1057 = vpack.c.b16 %v994, %v993
    %v1058 = vpack.c.b16 %v996, %v995
    %v1059 = vpack.c.b16 %v998, %v997
    %v1060 = vpack.c.b16 %v1000, %v999
    %v1061 = vpack.c.b16 %v1002, %v1001
    %v1062 = vpack.c.b16 %v1004, %v1003
    %v1063 = vpack.c.b16 %v1006, %v1005
    %v1064 = vpack.c.b16 %v1008, %v1007
    %v1065 = vpack.c.b16 %v1010, %v1009
    %v1066 = vpack.c.b16 %v1012, %v1011
    %v1067 = vpack.c.b16 %v1014, %v1013
    %v1068 = vpack.c.b16 %v1016, %v1015
    %v1069 = vpack.c.b16 %v1018, %v1017
    %v1070 = vpack.c.b16 %v1020, %v1019
    %v1071 = vpack.c.b16 %v1022, %v1021
    %v1072 = vpack.c.b16 %v1024, %v1023
    %v1073 = vpack.c.b16 %v1026, %v1025
    %v1074 = vpack.c.b16 %v1028, %v1027
    %v1075 = vpack.c.b16 %v1030, %v1029
    %v1076 = vpack.c.b16 %v1032, %v1031
    %v1077 = vpack.c.b16 %v1034, %v1033
    %v1078 = vpack.c.b16 %v1036, %v1035
    %v1079 = vpack.c.b16 %v1038, %v1037
    %v1080 = vpack.c.b16 %v1040, %v1039
    %1121 = vmatprep.subr.bf16.mxu0 0
    %1122 = vmatpush1.bf16.msra.mxu0 %v1041
    %1123 = vmatprep.subr.bf16.mxu0 0
    %1124 = vmatpush1.bf16.msra.mxu0 %v1042
    %1125 = vmatprep.subr.bf16.mxu0 0
    %1126 = vmatpush1.bf16.msra.mxu0 %v1043
    %1127 = vmatprep.subr.bf16.mxu0 0
    %1128 = vmatpush1.bf16.msra.mxu0 %v1044
    %1129 = vmatprep.subr.bf16.mxu0 0
    %1130 = vmatpush1.bf16.msra.mxu0 %v1045
    %1131 = vmatprep.subr.bf16.mxu0 0
    %1132 = vmatpush1.bf16.msra.mxu0 %v1046
    %1133 = vmatprep.subr.bf16.mxu0 0
    %1134 = vmatpush1.bf16.msra.mxu0 %v1047
    %1135 = vmatprep.subr.bf16.mxu0 0
    %1136 = vmatpush1.bf16.msra.mxu0 %v1048
    %1137 = vmatprep.subr.bf16.mxu0 0
    %1138 = vmatpush1.bf16.msra.mxu0 %v1049
    %1139 = vmatprep.subr.bf16.mxu0 0
    %1140 = vmatpush1.bf16.msra.mxu0 %v1050
    %1141 = vmatprep.subr.bf16.mxu0 0
    %1142 = vmatpush1.bf16.msra.mxu0 %v1051
    %1143 = vmatprep.subr.bf16.mxu0 0
    %1144 = vmatpush1.bf16.msra.mxu0 %v1052
    %1145 = vmatprep.subr.bf16.mxu0 0
    %1146 = vmatpush1.bf16.msra.mxu0 %v1053
    %1147 = vmatprep.subr.bf16.mxu0 0
    %1148 = vmatpush1.bf16.msra.mxu0 %v1054
    %1149 = vmatprep.subr.bf16.mxu0 0
    %1150 = vmatpush1.bf16.msra.mxu0 %v1055
    %1151 = vmatprep.subr.bf16.mxu0 0
    %1152 = vmatpush1.bf16.msra.mxu0 %v1056
    %1153 = vmatprep.mubr.bf16.mxu0 %v369
    %1154 = vmatmul.mubr.bf16.gmra.mrb[0].mxu0 %v153
    %v1155 = vpop.f32.mrb[0].mxu0
    %v1156 = vadd.f32 0.0, %v1155
    %v1157 = vpop.f32.mrb[0].mxu0
    %v1158 = vpop.f32.mrb[0].mxu0
    %v1159 = vadd.f32 0.0, %v1158
    %v1160 = vpop.f32.mrb[0].mxu0
    %1161 = vmatprep.mubr.bf16.mxu0 %v370
    %1162 = vmatmul.mubr.bf16.gmra.mrb[0].mxu0 %v154
    %v1163 = vpop.f32.mrb[0].mxu0
    %v1164 = vadd.f32 0.0, %v1163
    %v1165 = vpop.f32.mrb[0].mxu0
    %v1166 = vpop.f32.mrb[0].mxu0
    %v1167 = vadd.f32 0.0, %v1166
    %v1168 = vpop.f32.mrb[0].mxu0
    %1169 = vmatprep.mubr.bf16.mxu0 %v371
    %1170 = vmatmul.mubr.bf16.gmra.mrb[0].mxu0 %v155
    %v1171 = vpop.f32.mrb[0].mxu0
    %v1172 = vadd.f32 0.0, %v1171
    %v1173 = vpop.f32.mrb[0].mxu0
    %v1174 = vpop.f32.mrb[0].mxu0
    %v1175 = vadd.f32 0.0, %v1174
    %v1176 = vpop.f32.mrb[0].mxu0
    %1177 = vmatprep.mubr.bf16.mxu0 %v372
    %1178 = vmatmul.mubr.bf16.gmra.mrb[0].mxu0 %v156
    %v1179 = vpop.f32.mrb[0].mxu0
    %v1180 = vadd.f32 0.0, %v1179
    %v1181 = vpop.f32.mrb[0].mxu0
    %v1182 = vpop.f32.mrb[0].mxu0
    %v1183 = vadd.f32 0.0, %v1182
    %v1184 = vpop.f32.mrb[0].mxu0
    %1185 = vmatprep.mubr.bf16.mxu0 %v373
    %1186 = vmatmul.mubr.bf16.gmra.mrb[0].mxu0 %v157
    %v1187 = vpop.f32.mrb[0].mxu0
    %v1188 = vadd.f32 0.0, %v1187
    %v1189 = vpop.f32.mrb[0].mxu0
    %v1190 = vpop.f32.mrb[0].mxu0
    %v1191 = vadd.f32 0.0, %v1190
    %v1192 = vpop.f32.mrb[0].mxu0
    %1193 = vmatprep.mubr.bf16.mxu0 %v374
    %1194 = vmatmul.mubr.bf16.gmra.mrb[0].mxu0 %v158
    %v1195 = vpop.f32.mrb[0].mxu0
    %v1196 = vadd.f32 0.0, %v1195
    %v1197 = vpop.f32.mrb[0].mxu0
    %v1198 = vpop.f32.mrb[0].mxu0
    %v1199 = vadd.f32 0.0, %v1198
    %v1200 = vpop.f32.mrb[0].mxu0
    %1201 = vmatprep.mubr.bf16.mxu0 %v375
    %1202 = vmatmul.mubr.bf16.gmra.mrb[0].mxu0 %v159
    %v1203 = vpop.f32.mrb[0].mxu0
    %v1204 = vadd.f32 0.0, %v1203
    %v1205 = vpop.f32.mrb[0].mxu0
    %v1206 = vpop.f32.mrb[0].mxu0
    %v1207 = vadd.f32 0.0, %v1206
    %v1208 = vpop.f32.mrb[0].mxu0
    %1209 = vmatprep.mubr.bf16.mxu0 %v376
    %1210 = vmatmul.mubr.bf16.gmra.mrb[0].mxu0 %v160
    %v1211 = vpop.f32.mrb[0].mxu0
    %v1212 = vadd.f32 0.0, %v1211
    %v1213 = vpop.f32.mrb[0].mxu0
    %v1214 = vpop.f32.mrb[0].mxu0
    %v1215 = vadd.f32 0.0, %v1214
    %v1216 = vpop.f32.mrb[0].mxu0
    %1217 = vdwg.mxu0
    %1218 = vmatprep.subr.bf16.mxu0 0
    %1219 = vmatpush1.bf16.msra.mxu0 %v1057
    %1220 = vmatprep.subr.bf16.mxu0 0
    %1221 = vmatpush1.bf16.msra.mxu0 %v1058
    %1222 = vmatprep.subr.bf16.mxu0 0
    %1223 = vmatpush1.bf16.msra.mxu0 %v1059
    %1224 = vmatprep.subr.bf16.mxu0 0
    %1225 = vmatpush1.bf16.msra.mxu0 %v1060
    %1226 = vmatprep.subr.bf16.mxu0 0
    %1227 = vmatpush1.bf16.msra.mxu0 %v1061
    %1228 = vmatprep.subr.bf16.mxu0 0
    %1229 = vmatpush1.bf16.msra.mxu0 %v1062
    %1230 = vmatprep.subr.bf16.mxu0 0
    %1231 = vmatpush1.bf16.msra.mxu0 %v1063
    %1232 = vmatprep.subr.bf16.mxu0 0
    %1233 = vmatpush1.bf16.msra.mxu0 %v1064
    %1234 = vmatprep.subr.bf16.mxu0 0
    %1235 = vmatpush1.bf16.msra.mxu0 %v1065
    %1236 = vmatprep.subr.bf16.mxu0 0
    %1237 = vmatpush1.bf16.msra.mxu0 %v1066
    %1238 = vmatprep.subr.bf16.mxu0 0
    %1239 = vmatpush1.bf16.msra.mxu0 %v1067
    %1240 = vmatprep.subr.bf16.mxu0 0
    %1241 = vmatpush1.bf16.msra.mxu0 %v1068
    %1242 = vmatprep.subr.bf16.mxu0 0
    %1243 = vmatpush1.bf16.msra.mxu0 %v1069
    %1244 = vmatprep.subr.bf16.mxu0 0
    %1245 = vmatpush1.bf16.msra.mxu0 %v1070
    %1246 = vmatprep.subr.bf16.mxu0 0
    %1247 = vmatpush1.bf16.msra.mxu0 %v1071
    %1248 = vmatprep.subr.bf16.mxu0 0
    %1249 = vmatpush1.bf16.msra.mxu0 %v1072
    %1250 = vmatprep.mubr.bf16.mxu0 %v689
    %1251 = vmatmul.mubr.bf16.gmra.mrb[0].mxu0 %v585
    %v1252 = vpop.f32.mrb[0].mxu0
    %v1253 = vadd.f32 %v1156, %v1252
    %v1254 = vpop.f32.mrb[0].mxu0
    %v1255 = vpop.f32.mrb[0].mxu0
    %v1256 = vadd.f32 %v1159, %v1255
    %v1257 = vpop.f32.mrb[0].mxu0
    %1258 = vmatprep.mubr.bf16.mxu0 %v690
    %1259 = vmatmul.mubr.bf16.gmra.mrb[0].mxu0 %v586
    %v1260 = vpop.f32.mrb[0].mxu0
    %v1261 = vadd.f32 %v1164, %v1260
    %v1262 = vpop.f32.mrb[0].mxu0
    %v1263 = vpop.f32.mrb[0].mxu0
    %v1264 = vadd.f32 %v1167, %v1263
    %v1265 = vpop.f32.mrb[0].mxu0
    %1266 = vmatprep.mubr.bf16.mxu0 %v691
    %1267 = vmatmul.mubr.bf16.gmra.mrb[0].mxu0 %v587
    %v1268 = vpop.f32.mrb[0].mxu0
    %v1269 = vadd.f32 %v1172, %v1268
    %v1270 = vpop.f32.mrb[0].mxu0
    %v1271 = vpop.f32.mrb[0].mxu0
    %v1272 = vadd.f32 %v1175, %v1271
    %v1273 = vpop.f32.mrb[0].mxu0
    %1274 = vmatprep.mubr.bf16.mxu0 %v692
    %1275 = vmatmul.mubr.bf16.gmra.mrb[0].mxu0 %v588
    %v1276 = vpop.f32.mrb[0].mxu0
    %v1277 = vadd.f32 %v1180, %v1276
    %v1278 = vpop.f32.mrb[0].mxu0
    %v1279 = vpop.f32.mrb[0].mxu0
    %v1280 = vadd.f32 %v1183, %v1279
    %v1281 = vpop.f32.mrb[0].mxu0
    %1282 = vmatprep.mubr.bf16.mxu0 %v693
    %1283 = vmatmul.mubr.bf16.gmra.mrb[0].mxu0 %v589
    %v1284 = vpop.f32.mrb[0].mxu0
    %v1285 = vadd.f32 %v1188, %v1284
    %v1286 = vpop.f32.mrb[0].mxu0
    %v1287 = vpop.f32.mrb[0].mxu0
    %v1288 = vadd.f32 %v1191, %v1287
    %v1289 = vpop.f32.mrb[0].mxu0
    %1290 = vmatprep.mubr.bf16.mxu0 %v694
    %1291 = vmatmul.mubr.bf16.gmra.mrb[0].mxu0 %v590
    %v1292 = vpop.f32.mrb[0].mxu0
    %v1293 = vadd.f32 %v1196, %v1292
    %v1294 = vpop.f32.mrb[0].mxu0
    %v1295 = vpop.f32.mrb[0].mxu0
    %v1296 = vadd.f32 %v1199, %v1295
    %v1297 = vpop.f32.mrb[0].mxu0
    %1298 = vmatprep.mubr.bf16.mxu0 %v695
    %1299 = vmatmul.mubr.bf16.gmra.mrb[0].mxu0 %v591
    %v1300 = vpop.f32.mrb[0].mxu0
    %v1301 = vadd.f32 %v1204, %v1300
    %v1302 = vpop.f32.mrb[0].mxu0
    %v1303 = vpop.f32.mrb[0].mxu0
    %v1304 = vadd.f32 %v1207, %v1303
    %v1305 = vpop.f32.mrb[0].mxu0
    %1306 = vmatprep.mubr.bf16.mxu0 %v696
    %1307 = vmatmul.mubr.bf16.gmra.mrb[0].mxu0 %v592
    %v1308 = vpop.f32.mrb[0].mxu0
    %v1309 = vadd.f32 %v1212, %v1308
    %v1310 = vpop.f32.mrb[0].mxu0
    %v1311 = vpop.f32.mrb[0].mxu0
    %v1312 = vadd.f32 %v1215, %v1311
    %v1313 = vpop.f32.mrb[0].mxu0
    %1314 = vdwg.mxu0
    %1315 = vmatprep.subr.bf16.mxu0 0
    %1316 = vmatpush1.bf16.msra.mxu0 %v1073
    %1317 = vmatprep.subr.bf16.mxu0 0
    %1318 = vmatpush1.bf16.msra.mxu0 %v1074
    %1319 = vmatprep.subr.bf16.mxu0 0
    %1320 = vmatpush1.bf16.msra.mxu0 %v1075
    %1321 = vmatprep.subr.bf16.mxu0 0
    %1322 = vmatpush1.bf16.msra.mxu0 %v1076
    %1323 = vmatprep.subr.bf16.mxu0 0
    %1324 = vmatpush1.bf16.msra.mxu0 %v1077
    %1325 = vmatprep.subr.bf16.mxu0 0
    %1326 = vmatpush1.bf16.msra.mxu0 %v1078
    %1327 = vmatprep.subr.bf16.mxu0 0
    %1328 = vmatpush1.bf16.msra.mxu0 %v1079
    %1329 = vmatprep.subr.bf16.mxu0 0
    %1330 = vmatpush1.bf16.msra.mxu0 %v1080
    %1331 = vmatprep.subr.bf16.mxu0 0
    %1332 = vmatpush1.bf16.msra.mxu0 0
    %1333 = vmatprep.subr.bf16.mxu0 0
    %1334 = vmatpush1.bf16.msra.mxu0 0
    %1335 = vmatprep.subr.bf16.mxu0 0
    %1336 = vmatpush1.bf16.msra.mxu0 0
    %1337 = vmatprep.subr.bf16.mxu0 0
    %1338 = vmatpush1.bf16.msra.mxu0 0
    %1339 = vmatprep.subr.bf16.mxu0 0
    %1340 = vmatpush1.bf16.msra.mxu0 0
    %1341 = vmatprep.subr.bf16.mxu0 0
    %1342 = vmatpush1.bf16.msra.mxu0 0
    %1343 = vmatprep.subr.bf16.mxu0 0
    %1344 = vmatpush1.bf16.msra.mxu0 0
    %1345 = vmatprep.subr.bf16.mxu0 0
    %1346 = vmatpush1.bf16.msra.mxu0 0
    %1347 = vmatprep.mubr.bf16.mxu0 0
    %1348 = vmatmul.mubr.bf16.gmra.mrb[0].mxu0 %v793
    %v1349 = vpop.f32.mrb[0].mxu0
    %v1350 = vadd.f32 %v1253, %v1349
    %v1351 = vpop.f32.mrb[0].mxu0
    %v1352 = vpop.f32.mrb[0].mxu0
    %v1353 = vadd.f32 %v1256, %v1352
    %v1354 = vpop.f32.mrb[0].mxu0
    %1355 = vmatprep.mubr.bf16.mxu0 0
    %1356 = vmatmul.mubr.bf16.gmra.mrb[0].mxu0 %v794
    %v1357 = vpop.f32.mrb[0].mxu0
    %v1358 = vadd.f32 %v1261, %v1357
    %v1359 = vpop.f32.mrb[0].mxu0
    %v1360 = vpop.f32.mrb[0].mxu0
    %v1361 = vadd.f32 %v1264, %v1360
    %v1362 = vpop.f32.mrb[0].mxu0
    %1363 = vmatprep.mubr.bf16.mxu0 0
    %1364 = vmatmul.mubr.bf16.gmra.mrb[0].mxu0 %v795
    %v1365 = vpop.f32.mrb[0].mxu0
    %v1366 = vadd.f32 %v1269, %v1365
    %v1367 = vpop.f32.mrb[0].mxu0
    %v1368 = vpop.f32.mrb[0].mxu0
    %v1369 = vadd.f32 %v1272, %v1368
    %v1370 = vpop.f32.mrb[0].mxu0
    %1371 = vmatprep.mubr.bf16.mxu0 0
    %1372 = vmatmul.mubr.bf16.gmra.mrb[0].mxu0 %v796
    %v1373 = vpop.f32.mrb[0].mxu0
    %v1374 = vadd.f32 %v1277, %v1373
    %v1375 = vpop.f32.mrb[0].mxu0
    %v1376 = vpop.f32.mrb[0].mxu0
    %v1377 = vadd.f32 %v1280, %v1376
    %v1378 = vpop.f32.mrb[0].mxu0
    %1379 = vmatprep.mubr.bf16.mxu0 0
    %1380 = vmatmul.mubr.bf16.gmra.mrb[0].mxu0 %v797
    %v1381 = vpop.f32.mrb[0].mxu0
    %v1382 = vadd.f32 %v1285, %v1381
    %v1383 = vpop.f32.mrb[0].mxu0
    %v1384 = vpop.f32.mrb[0].mxu0
    %v1385 = vadd.f32 %v1288, %v1384
    %v1386 = vpop.f32.mrb[0].mxu0
    %1387 = vmatprep.mubr.bf16.mxu0 0
    %1388 = vmatmul.mubr.bf16.gmra.mrb[0].mxu0 %v798
    %v1389 = vpop.f32.mrb[0].mxu0
    %v1390 = vadd.f32 %v1293, %v1389
    %v1391 = vpop.f32.mrb[0].mxu0
    %v1392 = vpop.f32.mrb[0].mxu0
    %v1393 = vadd.f32 %v1296, %v1392
    %v1394 = vpop.f32.mrb[0].mxu0
    %1395 = vmatprep.mubr.bf16.mxu0 0
    %1396 = vmatmul.mubr.bf16.gmra.mrb[0].mxu0 %v799
    %v1397 = vpop.f32.mrb[0].mxu0
    %v1398 = vadd.f32 %v1301, %v1397
    %v1399 = vpop.f32.mrb[0].mxu0
    %v1400 = vpop.f32.mrb[0].mxu0
    %v1401 = vadd.f32 %v1304, %v1400
    %v1402 = vpop.f32.mrb[0].mxu0
    %1403 = vmatprep.mubr.bf16.mxu0 0
    %1404 = vmatmul.mubr.bf16.gmra.mrb[0].mxu0 %v800
    %v1405 = vpop.f32.mrb[0].mxu0
    %v1406 = vadd.f32 %v1309, %v1405
    %v1407 = vpop.f32.mrb[0].mxu0
    %v1408 = vpop.f32.mrb[0].mxu0
    %v1409 = vadd.f32 %v1312, %v1408
    %v1410 = vpop.f32.mrb[0].mxu0
    %1411 = vdwg.mxu0
    %v1412 = vld [vmem:[%s3] sm:$0x3]
    %vm1413 = vcmp.eq.s32.totalorder %v39, 0
    %vm1414 = vcmp.eq.s32.totalorder %v40, 0
    %vm1415 = vcmp.eq.s32.totalorder %v41, 0
    %vm1416 = vcmp.eq.s32.totalorder %v42, 0
    %vm1417 = vcmp.eq.s32.totalorder %v43, 0
    %vm1418 = vcmp.eq.s32.totalorder %v44, 0
    %vm1419 = vcmp.eq.s32.totalorder %v45, 0
    %vm1420 = vcmp.eq.s32.totalorder %v46, 0
    %vm1421 = vcmp.eq.s32.totalorder %v47, 0
    %vm1422 = vcmp.eq.s32.totalorder %v48, 0
    %vm1423 = vcmp.eq.s32.totalorder %v49, 0
    %vm1424 = vcmp.eq.s32.totalorder %v50, 0
    %vm1425 = vcmp.eq.s32.totalorder %v51, 0
    %vm1426 = vcmp.eq.s32.totalorder %v52, 0
    %vm1427 = vcmp.eq.s32.totalorder %v53, 0
    %vm1428 = vcmp.eq.s32.totalorder %v54, 0
    %v1429 = vsel %vm1413, 1, 0
    %v1430 = vsel %vm1414, 1, 0
    %v1431 = vsel %vm1415, 1, 0
    %v1432 = vsel %vm1416, 1, 0
    %v1433 = vsel %vm1417, 1, 0
    %v1434 = vsel %vm1418, 1, 0
    %v1435 = vsel %vm1419, 1, 0
    %v1436 = vsel %vm1420, 1, 0
    %v1437 = vsel %vm1421, 1, 0
    %v1438 = vsel %vm1422, 1, 0
    %v1439 = vsel %vm1423, 1, 0
    %v1440 = vsel %vm1424, 1, 0
    %v1441 = vsel %vm1425, 1, 0
    %v1442 = vsel %vm1426, 1, 0
    %v1443 = vsel %vm1427, 1, 0
    %v1444 = vsel %vm1428, 1, 0
    %1445 = vset.pattern.permute.xlu0 7
    %1446 = vperm.xlu0 %1445, %v1429
    %v1447 = vpop.permute.xlu0 %1446
    %1448 = vset.pattern.permute.xlu0 7
    %1449 = vperm.xlu0 %1448, %v1430
    %v1450 = vpop.permute.xlu0 %1449
    %1451 = vset.pattern.permute.xlu0 7
    %1452 = vperm.xlu0 %1451, %v1431
    %v1453 = vpop.permute.xlu0 %1452
    %1454 = vset.pattern.permute.xlu0 7
    %1455 = vperm.xlu0 %1454, %v1432
    %v1456 = vpop.permute.xlu0 %1455
    %1457 = vset.pattern.permute.xlu0 7
    %1458 = vperm.xlu0 %1457, %v1433
    %v1459 = vpop.permute.xlu0 %1458
    %1460 = vset.pattern.permute.xlu0 7
    %1461 = vperm.xlu0 %1460, %v1434
    %v1462 = vpop.permute.xlu0 %1461
    %1463 = vset.pattern.permute.xlu0 7
    %1464 = vperm.xlu0 %1463, %v1435
    %v1465 = vpop.permute.xlu0 %1464
    %1466 = vset.pattern.permute.xlu0 7
    %1467 = vperm.xlu0 %1466, %v1436
    %v1468 = vpop.permute.xlu0 %1467
    %1469 = vset.pattern.permute.xlu0 7
    %1470 = vperm.xlu0 %1469, %v1437
    %v1471 = vpop.permute.xlu0 %1470
    %1472 = vset.pattern.permute.xlu0 7
    %1473 = vperm.xlu0 %1472, %v1438
    %v1474 = vpop.permute.xlu0 %1473
    %1475 = vset.pattern.permute.xlu0 7
    %1476 = vperm.xlu0 %1475, %v1439
    %v1477 = vpop.permute.xlu0 %1476
    %1478 = vset.pattern.permute.xlu0 7
    %1479 = vperm.xlu0 %1478, %v1440
    %v1480 = vpop.permute.xlu0 %1479
    %1481 = vset.pattern.permute.xlu0 7
    %1482 = vperm.xlu0 %1481, %v1441
    %v1483 = vpop.permute.xlu0 %1482
    %1484 = vset.pattern.permute.xlu0 7
    %1485 = vperm.xlu0 %1484, %v1442
    %v1486 = vpop.permute.xlu0 %1485
    %1487 = vset.pattern.permute.xlu0 7
    %1488 = vperm.xlu0 %1487, %v1443
    %v1489 = vpop.permute.xlu0 %1488
    %1490 = vset.pattern.permute.xlu0 7
    %1491 = vperm.xlu0 %1490, %v1444
    %v1492 = vpop.permute.xlu0 %1491
    %vm1493 = vcmp.eq.s32.totalorder %v1447, 1
    %vm1494 = vcmp.eq.s32.totalorder %v1450, 1
    %vm1495 = vcmp.eq.s32.totalorder %v1453, 1
    %vm1496 = vcmp.eq.s32.totalorder %v1456, 1
    %vm1497 = vcmp.eq.s32.totalorder %v1459, 1
    %vm1498 = vcmp.eq.s32.totalorder %v1462, 1
    %vm1499 = vcmp.eq.s32.totalorder %v1465, 1
    %vm1500 = vcmp.eq.s32.totalorder %v1468, 1
    %vm1501 = vcmp.eq.s32.totalorder %v1471, 1
    %vm1502 = vcmp.eq.s32.totalorder %v1474, 1
    %vm1503 = vcmp.eq.s32.totalorder %v1477, 1
    %vm1504 = vcmp.eq.s32.totalorder %v1480, 1
    %vm1505 = vcmp.eq.s32.totalorder %v1483, 1
    %vm1506 = vcmp.eq.s32.totalorder %v1486, 1
    %vm1507 = vcmp.eq.s32.totalorder %v1489, 1
    %vm1508 = vcmp.eq.s32.totalorder %v1492, 1
    %v1509 = vlaneseq
    %v1510 = vshrl.u32 %v1509, 7
    %v1511 = vsub.s32 0, %v1510
    %v1512 = vrot.slane %v1412, %v1511
    %v1513 = vlaneseq
    %v1514 = vshrl.u32 %v1513, 7
    %v1515 = vsub.s32 1, %v1514
    %v1516 = vrot.slane %v1412, %v1515
    %v1517 = vsel %vm1493, %v1512, %v1516
    %v1518 = vsel %vm1494, %v1512, %v1516
    %v1519 = vsel %vm1495, %v1512, %v1516
    %v1520 = vsel %vm1496, %v1512, %v1516
    %v1521 = vsel %vm1497, %v1512, %v1516
    %v1522 = vsel %vm1498, %v1512, %v1516
    %v1523 = vsel %vm1499, %v1512, %v1516
    %v1524 = vsel %vm1500, %v1512, %v1516
    %v1525 = vsel %vm1501, %v1512, %v1516
    %v1526 = vsel %vm1502, %v1512, %v1516
    %v1527 = vsel %vm1503, %v1512, %v1516
    %v1528 = vsel %vm1504, %v1512, %v1516
    %v1529 = vsel %vm1505, %v1512, %v1516
    %v1530 = vsel %vm1506, %v1512, %v1516
    %v1531 = vsel %vm1507, %v1512, %v1516
    %v1532 = vsel %vm1508, %v1512, %v1516
    %v1533 = vld [vmem:[%s1] sm:$0xf]
    %v1534 = vld [vmem:[%s1 + $0x4] sm:$0xf]
    %v1535 = vld [vmem:[%s1 + $0x8] sm:$0xf]
    %v1536 = vld [vmem:[%s1 + $0xc] sm:$0xf]
    %v1537 = vld [vmem:[%s1 + $0x10] sm:$0xf]
    %v1538 = vld [vmem:[%s1 + $0x14] sm:$0xf]
    %v1539 = vld [vmem:[%s1 + $0x18] sm:$0xf]
    %v1540 = vld [vmem:[%s1 + $0x1c] sm:$0xf]
    %v1541 = vld [vmem:[%s1 + $0x20] sm:$0xf]
    %v1542 = vld [vmem:[%s1 + $0x24] sm:$0xf]
    %v1543 = vld [vmem:[%s1 + $0x28] sm:$0xf]
    %v1544 = vld [vmem:[%s1 + $0x2c] sm:$0xf]
    %v1545 = vld [vmem:[%s1 + $0x30] sm:$0xf]
    %v1546 = vld [vmem:[%s1 + $0x34] sm:$0xf]
    %v1547 = vld [vmem:[%s1 + $0x38] sm:$0xf]
    %v1548 = vld [vmem:[%s1 + $0x3c] sm:$0xf]
    %v1549 = vunpack.c.l.bf16 %v1533
    %v1550 = vunpack.c.l.bf16 %v1534
    %v1551 = vunpack.c.l.bf16 %v1535
    %v1552 = vunpack.c.l.bf16 %v1536
    %v1553 = vunpack.c.l.bf16 %v1537
    %v1554 = vunpack.c.l.bf16 %v1538
    %v1555 = vunpack.c.l.bf16 %v1539
    %v1556 = vunpack.c.l.bf16 %v1540
    %v1557 = vunpack.c.l.bf16 %v1541
    %v1558 = vunpack.c.l.bf16 %v1542
    %v1559 = vunpack.c.l.bf16 %v1543
    %v1560 = vunpack.c.l.bf16 %v1544
    %v1561 = vunpack.c.l.bf16 %v1545
    %v1562 = vunpack.c.l.bf16 %v1546
    %v1563 = vunpack.c.l.bf16 %v1547
    %v1564 = vunpack.c.l.bf16 %v1548
    %v1565 = vadd.f32 %v1549, %v1350
    %v1566 = vadd.f32 %v1550, %v1353
    %v1567 = vadd.f32 %v1551, %v1358
    %v1568 = vadd.f32 %v1552, %v1361
    %v1569 = vadd.f32 %v1553, %v1366
    %v1570 = vadd.f32 %v1554, %v1369
    %v1571 = vadd.f32 %v1555, %v1374
    %v1572 = vadd.f32 %v1556, %v1377
    %v1573 = vadd.f32 %v1557, %v1382
    %v1574 = vadd.f32 %v1558, %v1385
    %v1575 = vadd.f32 %v1559, %v1390
    %v1576 = vadd.f32 %v1560, %v1393
    %v1577 = vadd.f32 %v1561, %v1398
    %v1578 = vadd.f32 %v1562, %v1401
    %v1579 = vadd.f32 %v1563, %v1406
    %v1580 = vadd.f32 %v1564, %v1409
    %v1581 = vadd.f32 %v1565, %v1517
    %v1582 = vadd.f32 %v1566, %v1518
    %v1583 = vadd.f32 %v1567, %v1519
    %v1584 = vadd.f32 %v1568, %v1520
    %v1585 = vadd.f32 %v1569, %v1521
    %v1586 = vadd.f32 %v1570, %v1522
    %v1587 = vadd.f32 %v1571, %v1523
    %v1588 = vadd.f32 %v1572, %v1524
    %v1589 = vadd.f32 %v1573, %v1525
    %v1590 = vadd.f32 %v1574, %v1526
    %v1591 = vadd.f32 %v1575, %v1527
    %v1592 = vadd.f32 %v1576, %v1528
    %v1593 = vadd.f32 %v1577, %v1529
    %v1594 = vadd.f32 %v1578, %v1530
    %v1595 = vadd.f32 %v1579, %v1531
    %v1596 = vadd.f32 %v1580, %v1532
    %1597 = vadd.xlane.f32.xlu0 %v1581
    %v1598 = vpop.xlane.xlu0 %1597
    %1599 = vadd.xlane.f32.xlu0 %v1582
    %v1600 = vpop.xlane.xlu0 %1599
    %1601 = vadd.xlane.f32.xlu0 %v1583
    %v1602 = vpop.xlane.xlu0 %1601
    %1603 = vadd.xlane.f32.xlu0 %v1584
    %v1604 = vpop.xlane.xlu0 %1603
    %1605 = vadd.xlane.f32.xlu0 %v1585
    %v1606 = vpop.xlane.xlu0 %1605
    %1607 = vadd.xlane.f32.xlu0 %v1586
    %v1608 = vpop.xlane.xlu0 %1607
    %1609 = vadd.xlane.f32.xlu0 %v1587
    %v1610 = vpop.xlane.xlu0 %1609
    %1611 = vadd.xlane.f32.xlu0 %v1588
    %v1612 = vpop.xlane.xlu0 %1611
    %1613 = vadd.xlane.f32.xlu0 %v1589
    %v1614 = vpop.xlane.xlu0 %1613
    %1615 = vadd.xlane.f32.xlu0 %v1590
    %v1616 = vpop.xlane.xlu0 %1615
    %1617 = vadd.xlane.f32.xlu0 %v1591
    %v1618 = vpop.xlane.xlu0 %1617
    %1619 = vadd.xlane.f32.xlu0 %v1592
    %v1620 = vpop.xlane.xlu0 %1619
    %1621 = vadd.xlane.f32.xlu0 %v1593
    %v1622 = vpop.xlane.xlu0 %1621
    %1623 = vadd.xlane.f32.xlu0 %v1594
    %v1624 = vpop.xlane.xlu0 %1623
    %1625 = vadd.xlane.f32.xlu0 %v1595
    %v1626 = vpop.xlane.xlu0 %1625
    %1627 = vadd.xlane.f32.xlu0 %v1596
    %v1628 = vpop.xlane.xlu0 %1627
    %v1629 = vrcp.pop 128.0
    %v1630 = vmul.f32 %v1598, %v1629
    %v1631 = vmul.f32 %v1600, %v1629
    %v1632 = vmul.f32 %v1602, %v1629
    %v1633 = vmul.f32 %v1604, %v1629
    %v1634 = vmul.f32 %v1606, %v1629
    %v1635 = vmul.f32 %v1608, %v1629
    %v1636 = vmul.f32 %v1610, %v1629
    %v1637 = vmul.f32 %v1612, %v1629
    %v1638 = vmul.f32 %v1614, %v1629
    %v1639 = vmul.f32 %v1616, %v1629
    %v1640 = vmul.f32 %v1618, %v1629
    %v1641 = vmul.f32 %v1620, %v1629
    %v1642 = vmul.f32 %v1622, %v1629
    %v1643 = vmul.f32 %v1624, %v1629
    %v1644 = vmul.f32 %v1626, %v1629
    %v1645 = vmul.f32 %v1628, %v1629
    %v1646 = vsub.f32 %v1581, %v1630
    %v1647 = vsub.f32 %v1582, %v1631
    %v1648 = vsub.f32 %v1583, %v1632
    %v1649 = vsub.f32 %v1584, %v1633
    %v1650 = vsub.f32 %v1585, %v1634
    %v1651 = vsub.f32 %v1586, %v1635
    %v1652 = vsub.f32 %v1587, %v1636
    %v1653 = vsub.f32 %v1588, %v1637
    %v1654 = vsub.f32 %v1589, %v1638
    %v1655 = vsub.f32 %v1590, %v1639
    %v1656 = vsub.f32 %v1591, %v1640
    %v1657 = vsub.f32 %v1592, %v1641
    %v1658 = vsub.f32 %v1593, %v1642
    %v1659 = vsub.f32 %v1594, %v1643
    %v1660 = vsub.f32 %v1595, %v1644
    %v1661 = vsub.f32 %v1596, %v1645
    %v1662 = vmul.f32 %v1646, %v1646
    %v1663 = vmul.f32 %v1647, %v1647
    %v1664 = vmul.f32 %v1648, %v1648
    %v1665 = vmul.f32 %v1649, %v1649
    %v1666 = vmul.f32 %v1650, %v1650
    %v1667 = vmul.f32 %v1651, %v1651
    %v1668 = vmul.f32 %v1652, %v1652
    %v1669 = vmul.f32 %v1653, %v1653
    %v1670 = vmul.f32 %v1654, %v1654
    %v1671 = vmul.f32 %v1655, %v1655
    %v1672 = vmul.f32 %v1656, %v1656
    %v1673 = vmul.f32 %v1657, %v1657
    %v1674 = vmul.f32 %v1658, %v1658
    %v1675 = vmul.f32 %v1659, %v1659
    %v1676 = vmul.f32 %v1660, %v1660
    %v1677 = vmul.f32 %v1661, %v1661
    %1678 = vadd.xlane.f32.xlu0 %v1662
    %v1679 = vpop.xlane.xlu0 %1678
    %1680 = vadd.xlane.f32.xlu0 %v1663
    %v1681 = vpop.xlane.xlu0 %1680
    %1682 = vadd.xlane.f32.xlu0 %v1664
    %v1683 = vpop.xlane.xlu0 %1682
    %1684 = vadd.xlane.f32.xlu0 %v1665
    %v1685 = vpop.xlane.xlu0 %1684
    %1686 = vadd.xlane.f32.xlu0 %v1666
    %v1687 = vpop.xlane.xlu0 %1686
    %1688 = vadd.xlane.f32.xlu0 %v1667
    %v1689 = vpop.xlane.xlu0 %1688
    %1690 = vadd.xlane.f32.xlu0 %v1668
    %v1691 = vpop.xlane.xlu0 %1690
    %1692 = vadd.xlane.f32.xlu0 %v1669
    %v1693 = vpop.xlane.xlu0 %1692
    %1694 = vadd.xlane.f32.xlu0 %v1670
    %v1695 = vpop.xlane.xlu0 %1694
    %1696 = vadd.xlane.f32.xlu0 %v1671
    %v1697 = vpop.xlane.xlu0 %1696
    %1698 = vadd.xlane.f32.xlu0 %v1672
    %v1699 = vpop.xlane.xlu0 %1698
    %1700 = vadd.xlane.f32.xlu0 %v1673
    %v1701 = vpop.xlane.xlu0 %1700
    %1702 = vadd.xlane.f32.xlu0 %v1674
    %v1703 = vpop.xlane.xlu0 %1702
    %1704 = vadd.xlane.f32.xlu0 %v1675
    %v1705 = vpop.xlane.xlu0 %1704
    %1706 = vadd.xlane.f32.xlu0 %v1676
    %v1707 = vpop.xlane.xlu0 %1706
    %1708 = vadd.xlane.f32.xlu0 %v1677
    %v1709 = vpop.xlane.xlu0 %1708
    %v1710 = vmul.f32 %v1679, %v1629
    %v1711 = vmul.f32 %v1681, %v1629
    %v1712 = vmul.f32 %v1683, %v1629
    %v1713 = vmul.f32 %v1685, %v1629
    %v1714 = vmul.f32 %v1687, %v1629
    %v1715 = vmul.f32 %v1689, %v1629
    %v1716 = vmul.f32 %v1691, %v1629
    %v1717 = vmul.f32 %v1693, %v1629
    %v1718 = vmul.f32 %v1695, %v1629
    %v1719 = vmul.f32 %v1697, %v1629
    %v1720 = vmul.f32 %v1699, %v1629
    %v1721 = vmul.f32 %v1701, %v1629
    %v1722 = vmul.f32 %v1703, %v1629
    %v1723 = vmul.f32 %v1705, %v1629
    %v1724 = vmul.f32 %v1707, %v1629
    %v1725 = vmul.f32 %v1709, %v1629
    %v1726 = vadd.f32 %v1710, 1e-05
    %v1727 = vadd.f32 %v1711, 1e-05
    %v1728 = vadd.f32 %v1712, 1e-05
    %v1729 = vadd.f32 %v1713, 1e-05
    %v1730 = vadd.f32 %v1714, 1e-05
    %v1731 = vadd.f32 %v1715, 1e-05
    %v1732 = vadd.f32 %v1716, 1e-05
    %v1733 = vadd.f32 %v1717, 1e-05
    %v1734 = vadd.f32 %v1718, 1e-05
    %v1735 = vadd.f32 %v1719, 1e-05
    %v1736 = vadd.f32 %v1720, 1e-05
    %v1737 = vadd.f32 %v1721, 1e-05
    %v1738 = vadd.f32 %v1722, 1e-05
    %v1739 = vadd.f32 %v1723, 1e-05
    %v1740 = vadd.f32 %v1724, 1e-05
    %v1741 = vadd.f32 %v1725, 1e-05
    %v1742 = vrsqrt.pop %v1726
    %v1743 = vrsqrt.pop %v1727
    %v1744 = vrsqrt.pop %v1728
    %v1745 = vrsqrt.pop %v1729
    %v1746 = vrsqrt.pop %v1730
    %v1747 = vrsqrt.pop %v1731
    %v1748 = vrsqrt.pop %v1732
    %v1749 = vrsqrt.pop %v1733
    %v1750 = vrsqrt.pop %v1734
    %v1751 = vrsqrt.pop %v1735
    %v1752 = vrsqrt.pop %v1736
    %v1753 = vrsqrt.pop %v1737
    %v1754 = vrsqrt.pop %v1738
    %v1755 = vrsqrt.pop %v1739
    %v1756 = vrsqrt.pop %v1740
    %v1757 = vrsqrt.pop %v1741
    %v1758 = vmul.f32 %v1646, %v1742
    %v1759 = vmul.f32 %v1647, %v1743
    %v1760 = vmul.f32 %v1648, %v1744
    %v1761 = vmul.f32 %v1649, %v1745
    %v1762 = vmul.f32 %v1650, %v1746
    %v1763 = vmul.f32 %v1651, %v1747
    %v1764 = vmul.f32 %v1652, %v1748
    %v1765 = vmul.f32 %v1653, %v1749
    %v1766 = vmul.f32 %v1654, %v1750
    %v1767 = vmul.f32 %v1655, %v1751
    %v1768 = vmul.f32 %v1656, %v1752
    %v1769 = vmul.f32 %v1657, %v1753
    %v1770 = vmul.f32 %v1658, %v1754
    %v1771 = vmul.f32 %v1659, %v1755
    %v1772 = vmul.f32 %v1660, %v1756
    %v1773 = vmul.f32 %v1661, %v1757
    %v1774 = vld [vmem:[%s4] sm:$0x1]
    %v1776 = vlaneseq
    %v1777 = vshrl.u32 %v1776, 7
    %v1778 = vsub.s32 0, %v1777
    %v1779 = vrot.slane %v1774, %v1778
    %v1781 = vmul.f32 %v1758, %v1779
    %v1782 = vmul.f32 %v1759, %v1779
    %v1783 = vmul.f32 %v1760, %v1779
    %v1784 = vmul.f32 %v1761, %v1779
    %v1785 = vmul.f32 %v1762, %v1779
    %v1786 = vmul.f32 %v1763, %v1779
    %v1787 = vmul.f32 %v1764, %v1779
    %v1788 = vmul.f32 %v1765, %v1779
    %v1789 = vmul.f32 %v1766, %v1779
    %v1790 = vmul.f32 %v1767, %v1779
    %v1791 = vmul.f32 %v1768, %v1779
    %v1792 = vmul.f32 %v1769, %v1779
    %v1793 = vmul.f32 %v1770, %v1779
    %v1794 = vmul.f32 %v1771, %v1779
    %v1795 = vmul.f32 %v1772, %v1779
    %v1796 = vmul.f32 %v1773, %v1779
    %v1797 = vld [vmem:[%s5] sm:$0x1]
    %v1799 = vlaneseq
    %v1800 = vshrl.u32 %v1799, 7
    %v1801 = vsub.s32 0, %v1800
    %v1802 = vrot.slane %v1797, %v1801
    %v1804 = vadd.f32 %v1781, %v1802
    %v1805 = vadd.f32 %v1782, %v1802
    %v1806 = vadd.f32 %v1783, %v1802
    %v1807 = vadd.f32 %v1784, %v1802
    %v1808 = vadd.f32 %v1785, %v1802
    %v1809 = vadd.f32 %v1786, %v1802
    %v1810 = vadd.f32 %v1787, %v1802
    %v1811 = vadd.f32 %v1788, %v1802
    %v1812 = vadd.f32 %v1789, %v1802
    %v1813 = vadd.f32 %v1790, %v1802
    %v1814 = vadd.f32 %v1791, %v1802
    %v1815 = vadd.f32 %v1792, %v1802
    %v1816 = vadd.f32 %v1793, %v1802
    %v1817 = vadd.f32 %v1794, %v1802
    %v1818 = vadd.f32 %v1795, %v1802
    %v1819 = vadd.f32 %v1796, %v1802
    %v1820 = vpack.c.bf16 %v1805, %v1804
    %v1821 = vpack.c.bf16 %v1807, %v1806
    %v1822 = vpack.c.bf16 %v1809, %v1808
    %v1823 = vpack.c.bf16 %v1811, %v1810
    %v1824 = vpack.c.bf16 %v1813, %v1812
    %v1825 = vpack.c.bf16 %v1815, %v1814
    %v1826 = vpack.c.bf16 %v1817, %v1816
    %v1827 = vpack.c.bf16 %v1819, %v1818
    %v1836 = vunpack.c.l.b16 %v1820
    %v1837 = vunpack.c.h.b16 %v1820
    %v1838 = vunpack.c.l.b16 %v1821
    %v1839 = vunpack.c.h.b16 %v1821
    %v1840 = vunpack.c.l.b16 %v1822
    %v1841 = vunpack.c.h.b16 %v1822
    %v1842 = vunpack.c.l.b16 %v1823
    %v1843 = vunpack.c.h.b16 %v1823
    %v1844 = vunpack.c.l.b16 %v1824
    %v1845 = vunpack.c.h.b16 %v1824
    %v1846 = vunpack.c.l.b16 %v1825
    %v1847 = vunpack.c.h.b16 %v1825
    %v1848 = vunpack.c.l.b16 %v1826
    %v1849 = vunpack.c.h.b16 %v1826
    %v1850 = vunpack.c.l.b16 %v1827
    %v1851 = vunpack.c.h.b16 %v1827
    %v1852 = vpack.c.b16 %v1836, %v1836
    %v1853 = vpack.c.b16 %v1837, %v1837
    %v1854 = vpack.c.b16 %v1838, %v1838
    %v1855 = vpack.c.b16 %v1839, %v1839
    %v1856 = vpack.c.b16 %v1840, %v1840
    %v1857 = vpack.c.b16 %v1841, %v1841
    %v1858 = vpack.c.b16 %v1842, %v1842
    %v1859 = vpack.c.b16 %v1843, %v1843
    %v1860 = vpack.c.b16 %v1844, %v1844
    %v1861 = vpack.c.b16 %v1845, %v1845
    %v1862 = vpack.c.b16 %v1846, %v1846
    %v1863 = vpack.c.b16 %v1847, %v1847
    %v1864 = vpack.c.b16 %v1848, %v1848
    %v1865 = vpack.c.b16 %v1849, %v1849
    %v1866 = vpack.c.b16 %v1850, %v1850
    %v1867 = vpack.c.b16 %v1851, %v1851
    %1884 = vst [vmem:[#allocation5] sm:$0xf] %v1852
    %1885 = vst [vmem:[#allocation5 + $0x4] sm:$0xf] %v1853
    %1886 = vst [vmem:[#allocation5 + $0x8] sm:$0xf] %v1854
    %1887 = vst [vmem:[#allocation5 + $0xc] sm:$0xf] %v1855
    %1888 = vst [vmem:[#allocation5 + $0x10] sm:$0xf] %v1856
    %1889 = vst [vmem:[#allocation5 + $0x14] sm:$0xf] %v1857
    %1890 = vst [vmem:[#allocation5 + $0x18] sm:$0xf] %v1858
    %1891 = vst [vmem:[#allocation5 + $0x1c] sm:$0xf] %v1859
    %1892 = vst [vmem:[#allocation5 + $0x20] sm:$0xf] %v1860
    %1893 = vst [vmem:[#allocation5 + $0x24] sm:$0xf] %v1861
    %1894 = vst [vmem:[#allocation5 + $0x28] sm:$0xf] %v1862
    %1895 = vst [vmem:[#allocation5 + $0x2c] sm:$0xf] %v1863
    %1896 = vst [vmem:[#allocation5 + $0x30] sm:$0xf] %v1864
    %1897 = vst [vmem:[#allocation5 + $0x34] sm:$0xf] %v1865
    %1898 = vst [vmem:[#allocation5 + $0x38] sm:$0xf] %v1866
    %1899 = vst [vmem:[#allocation5 + $0x3c] sm:$0xf] %v1867
    // Predicated region
    $region30: #{tpu_custom_call.1} parent=1 // pred_check
      _
    $region31: #{tpu_custom_call.1} parent=1 // pred_check_branch
      %1901 = sbr.rel (0) target = $region33
    $region32: #{tpu_custom_call.1} parent=1 // pred_region
      %s1903 = ssub.s32 1024, 1024
      %1904 = vsyncadd [#allocation4], %s1903
      %s1905 = sshll.u32 [#allocation5], 4
      %s1906 = int_to_ptr.vmem [resolvable:$true] %s1905
      %1911 = dma.vmem_to_hbm [thread:$0]  %s1906, 1024, %s6, [#allocation4], 64, 64, 4
    $region33: #{tpu_custom_call.1} parent=1 // pred_fallthru
      _
    // Predicated region
    $region34: #{tpu_custom_call.1} parent=1 // pred_check
      _
    $region35: #{tpu_custom_call.1} parent=1 // pred_check_branch
      %1913 = sbr.rel (0) target = $region37
    $region36: #{tpu_custom_call.1} parent=1 // pred_region
      %1914 = dma.done [#allocation4], 1024
    $region37: #{tpu_custom_call.1} parent=1 // pred_fallthru
      _
    %1915 = vsyncpa [#allocation3], 1
    %1916 = vsyncpa [#allocation4], 1

</llo_original>
